<compile_context>
chip_gen: v7x
topology: tpu7x:2x2x1
jax: 0.10.0
libtpu: 0.0.40
codegen_flags: <defaults>
</compile_context>

<pallas_src>
import functools

import jax
import jax.numpy as jnp
from jax.experimental import pallas as pl
from jax.experimental.pallas import tpu as pltpu

LANE = 128  # lane width: pad all feature axes to this


def _round_up(v, m):
    return (v + m - 1) // m * m


def _pad2d(a, rows, cols):
    return jnp.pad(a, ((0, rows - a.shape[0]), (0, cols - a.shape[1])))


def _fused_sage_kernel(adj_ref, x_ref, w1s_ref, w1n_ref, b1_ref,
                       w2s_ref, w2n_ref, b2_ref, out_ref, h1_ref,
                       *, tm, out_valid):
    """Fused 2-layer GraphSAGE forward for one TM-row tile of nodes.

    grid = (phase, row tile).  phase 0 -> layer 1 (+ReLU) into the VMEM scratch h1_ref,
    phase 1 -> layer 2 (+masked log_softmax) into out_ref.

    adj_ref : (TM, Np)  bf16  row-normalized adjacency stripe (streamed per tile)
    x_ref   : (Np, Cp)  bf16  full input features (VMEM-resident)
    w*_ref  : bf16 weights (resident), b*_ref f32 biases
    h1_ref  : (Np, Hp)  bf16  VMEM scratch carrying layer-1 activations across phases
    out_ref : (TM, Op)  f32   final log-probabilities tile
    """
    phase = pl.program_id(0)
    row0 = pl.multiple_of(pl.program_id(1) * tm, tm)

    @pl.when(phase == 0)
    def _layer1():
        # mean aggregation over ALL nodes (full-K contraction), bf16 MXU, f32 accumulate
        h_nb = jnp.dot(adj_ref[...], x_ref[...],
                       preferred_element_type=jnp.float32)                 # (TM, Cp) f32
        x_self = x_ref[pl.ds(row0, tm), :]                                 # (TM, Cp) bf16
        h = (jnp.dot(x_self, w1s_ref[...], preferred_element_type=jnp.float32)
             + jnp.dot(h_nb.astype(jnp.bfloat16), w1n_ref[...],
                       preferred_element_type=jnp.float32)
             + b1_ref[...])                                                # (TM, Hp) f32
        h1_ref[pl.ds(row0, tm), :] = jnp.maximum(h, 0.0).astype(jnp.bfloat16)

    @pl.when(phase == 1)
    def _layer2():
        h_nb = jnp.dot(adj_ref[...], h1_ref[...],
                       preferred_element_type=jnp.float32)                 # (TM, Hp) f32
        h_self = h1_ref[pl.ds(row0, tm), :]                                # (TM, Hp) bf16
        z = (jnp.dot(h_self, w2s_ref[...], preferred_element_type=jnp.float32)
             + jnp.dot(h_nb.astype(jnp.bfloat16), w2n_ref[...],
                       preferred_element_type=jnp.float32)
             + b2_ref[...])                                                # (TM, Op) f32
        # mask padded logit lanes so they don't corrupt the softmax normalizer
        col = jax.lax.broadcasted_iota(jnp.int32, z.shape, 1)
        z = jnp.where(col < out_valid, z, jnp.float32(-1e30))
        m = jnp.max(z, axis=1, keepdims=True)
        z = z - m
        lse = jnp.log(jnp.sum(jnp.exp(z), axis=1, keepdims=True))
        out_ref[...] = z - lse                                             # log_softmax(dim=1)


def graphsage_prepare(adj_norm, params):
    """One-time pad + cast of the graph and parameters (amortized across forward passes)."""
    n = adj_norm.shape[0]
    cin, hid = params["w1_self"].shape
    out_ch = params["w2_self"].shape[1]

    np_ = _round_up(n, LANE)
    # bigger row tile cuts grid-step overhead and matches the 256-wide MXU on v6e/v7x
    tm = 256 if np_ % 256 == 0 else LANE
    cp = _round_up(cin, LANE)
    hp = _round_up(hid, LANE)
    op = _round_up(out_ch, LANE)

    return dict(
        n=n, out_ch=out_ch, np_=np_, tm=tm, cp=cp, hp=hp, op=op,
        adj=_pad2d(adj_norm, np_, np_).astype(jnp.bfloat16),
        w1s=_pad2d(params["w1_self"], cp, hp).astype(jnp.bfloat16),
        w1n=_pad2d(params["w1_neigh"], cp, hp).astype(jnp.bfloat16),
        b1=_pad2d(params["b1"], 1, hp).astype(jnp.float32),
        w2s=_pad2d(params["w2_self"], hp, op).astype(jnp.bfloat16),
        w2n=_pad2d(params["w2_neigh"], hp, op).astype(jnp.bfloat16),
        b2=_pad2d(params["b2"], 1, op).astype(jnp.float32),
    )


def graphsage_forward(prep, x):
    """Forward pass of GraphSAGEModel on a prepared (padded/cast) graph + params."""
    n, out_ch = prep["n"], prep["out_ch"]
    np_, tm, cp, hp, op = prep["np_"], prep["tm"], prep["cp"], prep["hp"], prep["op"]
    num_tiles = np_ // tm

    x_bf16 = _pad2d(x, np_, cp).astype(jnp.bfloat16)

    kernel = functools.partial(_fused_sage_kernel, tm=tm, out_valid=out_ch)

    flops = (2 * np_ * np_ * cp + 2 * 2 * np_ * cp * hp       # layer 1: agg + 2 weight dots
             + 2 * np_ * np_ * hp + 2 * 2 * np_ * hp * op)    # layer 2
    transcendentals = np_ * op + np_                           # exp + log in log_softmax
    bytes_accessed = (2 * np_ * np_ * 2                        # adj streamed once per phase
                      + np_ * cp * 2                           # features
                      + 2 * (cp * hp + hp * op) * 2 + (hp + op) * 4
                      + np_ * op * 4)                          # output

    # VMEM: 2x adj stripe + 2x resident feats + h1 scratch + 2x out tile + weights/biases
    vmem_need = (2 * tm * np_ * 2 + 2 * np_ * cp * 2 + np_ * hp * 2
                 + 2 * tm * op * 4 + 2 * (cp * hp + hp * op) * 2 + (hp + op) * 4)
    vmem_limit = int(min(max(2 * vmem_need, 16 * 1024 * 1024), 64 * 1024 * 1024))

    out = pl.pallas_call(
        kernel,
        out_shape=jax.ShapeDtypeStruct((np_, op), jnp.float32),
        grid=(2, num_tiles),                                   # (phase, row tile)
        in_specs=[
            pl.BlockSpec((tm, np_), lambda p, i: (i, 0)),      # adj row stripe (streamed)
            pl.BlockSpec((np_, cp), lambda p, i: (0, 0)),      # full features (resident)
            pl.BlockSpec((cp, hp), lambda p, i: (0, 0)),       # W1_self
            pl.BlockSpec((cp, hp), lambda p, i: (0, 0)),       # W1_neigh
            pl.BlockSpec((1, hp), lambda p, i: (0, 0)),        # b1
            pl.BlockSpec((hp, op), lambda p, i: (0, 0)),       # W2_self
            pl.BlockSpec((hp, op), lambda p, i: (0, 0)),       # W2_neigh
            pl.BlockSpec((1, op), lambda p, i: (0, 0)),        # b2
        ],
        out_specs=pl.BlockSpec((tm, op), lambda p, i: (i, 0)),
        scratch_shapes=[pltpu.VMEM((np_, hp), jnp.bfloat16)],  # h1 carried across phases
        compiler_params=pltpu.CompilerParams(
            # phase 1 reads every tile's phase-0 result from the shared scratch, so both
            # grid axes must stay sequential; do NOT mark the tile axis "parallel".
            dimension_semantics=("arbitrary", "arbitrary"),
            vmem_limit_bytes=vmem_limit,
        ),
        cost_estimate=pl.CostEstimate(flops=flops,
                                      transcendentals=transcendentals,
                                      bytes_accessed=bytes_accessed),
    )(prep["adj"], x_bf16, prep["w1s"], prep["w1n"], prep["b1"],
      prep["w2s"], prep["w2n"], prep["b2"])

    return out[:n, :out_ch]


def _init_params(key, in_channels, hidden_channels, out_channels):
    ks = jax.random.split(key, 6)

    def lin(k, fan_in, fan_out):
        # nn.Linear-style init, stored pre-transposed as (in, out) for the kernel
        bound = 1.0 / jnp.sqrt(fan_in)
        return jax.random.uniform(k, (fan_in, fan_out), jnp.float32, -bound, bound)

    def bias(k, fan_in, fan_out):
        bound = 1.0 / jnp.sqrt(fan_in)
        return jax.random.uniform(k, (1, fan_out), jnp.float32, -bound, bound)

    return {
        "w1_self": lin(ks[0], in_channels, hidden_channels),
        "w1_neigh": lin(ks[1], in_channels, hidden_channels),
        "b1": bias(ks[2], in_channels, hidden_channels),
        "w2_self": lin(ks[3], hidden_channels, out_channels),
        "w2_neigh": lin(ks[4], hidden_channels, out_channels),
        "b2": bias(ks[5], hidden_channels, out_channels),
    }


def _reference(adj_norm, x, p):
    h_n = adj_norm @ x
    h1 = jnp.maximum(x @ p["w1_self"] + h_n @ p["w1_neigh"] + p["b1"], 0.0)
    h_n2 = adj_norm @ h1
    h2 = h1 @ p["w2_self"] + h_n2 @ p["w2_neigh"] + p["b2"]
    return jax.nn.log_softmax(h2, axis=1)


if __name__ == "__main__":
    key = jax.random.PRNGKey(0)
    k_x, k_adj, k_p = jax.random.split(key, 3)

    N = 256                      # number of graph nodes
    IN_CH, HID_CH, OUT_CH = 16, 32, 8

    # node features
    x = jax.random.normal(k_x, (N, IN_CH), jnp.float32)

    # random directed graph -> dense adjacency, row-normalized (mean aggregator)
    adj = (jax.random.uniform(k_adj, (N, N)) < 0.1).astype(jnp.float32)
    deg = jnp.maximum(adj.sum(axis=1, keepdims=True), 1.0)
    adj_norm = adj / deg

    params = _init_params(k_p, IN_CH, HID_CH, OUT_CH)

    prep = graphsage_prepare(adj_norm, params)   # one-time pad/cast, reused across calls
    out = graphsage_forward(prep, x)
    out = jax.block_until_ready(out)

    ref = _reference(adj_norm, x, params)
    assert out.shape == (N, OUT_CH)
    max_err = float(jnp.max(jnp.abs(out - ref)))
    # adjacency, features and weights all run on the bf16 MXU path (f32 accumulation),
    # so compare against the f32 reference with a bf16-appropriate tolerance
    assert jnp.allclose(out, ref, atol=5e-2, rtol=5e-2), f"max abs err {max_err}"

    print("KERNEL_OK")
</pallas_src>

<mosaic_0001>
module attributes {stable_mosaic.version = 11 : i64} {
  func.func @_fused_sage_kernel(%arg0: i32, %arg1: i32, %arg2: memref<256x256xbf16, #tpu.memory_space<vmem>>, %arg3: memref<256x128xbf16, #tpu.memory_space<vmem>>, %arg4: memref<128x128xbf16, #tpu.memory_space<vmem>>, %arg5: memref<128x128xbf16, #tpu.memory_space<vmem>>, %arg6: memref<1x128xf32, #tpu.memory_space<vmem>>, %arg7: memref<128x128xbf16, #tpu.memory_space<vmem>>, %arg8: memref<128x128xbf16, #tpu.memory_space<vmem>>, %arg9: memref<1x128xf32, #tpu.memory_space<vmem>>, %arg10: memref<256x128xf32, #tpu.memory_space<vmem>>, %arg11: memref<256x128xbf16, #tpu.memory_space<vmem>>) attributes {dimension_semantics = [#tpu.dimension_semantics<arbitrary>, #tpu.dimension_semantics<arbitrary>], iteration_bounds = array<i64: 2, 1>, scalar_prefetch = 0 : i64, scratch_operands = 1 : i64, tpu.core_type = #tpu.core_type<tc>, window_params = [{transform_indices = @transform_0, window_bounds = array<i64: 256, 256>}, {pipeline_mode = #tpu.pipeline_mode<synchronous>, transform_indices = @transform_1, window_bounds = array<i64: 256, 128>}, {pipeline_mode = #tpu.pipeline_mode<synchronous>, transform_indices = @transform_2, window_bounds = array<i64: 128, 128>}, {pipeline_mode = #tpu.pipeline_mode<synchronous>, transform_indices = @transform_3, window_bounds = array<i64: 128, 128>}, {pipeline_mode = #tpu.pipeline_mode<synchronous>, transform_indices = @transform_4, window_bounds = array<i64: 1, 128>}, {pipeline_mode = #tpu.pipeline_mode<synchronous>, transform_indices = @transform_5, window_bounds = array<i64: 128, 128>}, {pipeline_mode = #tpu.pipeline_mode<synchronous>, transform_indices = @transform_6, window_bounds = array<i64: 128, 128>}, {pipeline_mode = #tpu.pipeline_mode<synchronous>, transform_indices = @transform_7, window_bounds = array<i64: 1, 128>}, {transform_indices = @transform_8, window_bounds = array<i64: 256, 128>}]} {
    %c256_i32 = arith.constant 256 : i32
    %0 = arith.muli %arg1, %c256_i32 : i32
    %1 = tpu.assume_multiple %0, 256 : i32
    %c0_i32 = arith.constant 0 : i32
    %2 = arith.cmpi eq, %arg0, %c0_i32 : i32
    %3 = arith.extui %2 : i1 to i32
    %c0_i32_0 = arith.constant 0 : i32
    %4 = arith.cmpi ne, %3, %c0_i32_0 : i32
    scf.if %4 {
      %c0 = arith.constant 0 : index
      %c0_2 = arith.constant 0 : index
      %8 = vector.load %arg2[%c0, %c0_2] : memref<256x256xbf16, #tpu.memory_space<vmem>>, vector<256x256xbf16>
      %c0_3 = arith.constant 0 : index
      %c0_4 = arith.constant 0 : index
      %9 = vector.load %arg3[%c0_3, %c0_4] : memref<256x128xbf16, #tpu.memory_space<vmem>>, vector<256x128xbf16>
      %cst = arith.constant dense<0.000000e+00> : vector<256x128xf32>
      %10 = tpu.matmul %8, %9, %cst {dimension_numbers = #tpu.dot_dimension_numbers<[1], [0], [0], [1], [0, 0, 1, 1], [], []>} : vector<256x256xbf16>, vector<256x128xbf16>, vector<256x128xf32> -> vector<256x128xf32>
      %11 = arith.index_cast %1 : i32 to index
      %c0_5 = arith.constant 0 : index
      %12 = vector.load %arg3[%11, %c0_5] : memref<256x128xbf16, #tpu.memory_space<vmem>>, vector<256x128xbf16>
      %c0_6 = arith.constant 0 : index
      %c0_7 = arith.constant 0 : index
      %13 = vector.load %arg4[%c0_6, %c0_7] : memref<128x128xbf16, #tpu.memory_space<vmem>>, vector<128x128xbf16>
      %cst_8 = arith.constant dense<0.000000e+00> : vector<256x128xf32>
      %14 = tpu.matmul %12, %13, %cst_8 {dimension_numbers = #tpu.dot_dimension_numbers<[1], [0], [0], [1], [0, 0, 1, 1], [], []>} : vector<256x128xbf16>, vector<128x128xbf16>, vector<256x128xf32> -> vector<256x128xf32>
      %15 = arith.truncf %10 : vector<256x128xf32> to vector<256x128xbf16>
      %c0_9 = arith.constant 0 : index
      %c0_10 = arith.constant 0 : index
      %16 = vector.load %arg5[%c0_9, %c0_10] : memref<128x128xbf16, #tpu.memory_space<vmem>>, vector<128x128xbf16>
      %cst_11 = arith.constant dense<0.000000e+00> : vector<256x128xf32>
      %17 = tpu.matmul %15, %16, %cst_11 {dimension_numbers = #tpu.dot_dimension_numbers<[1], [0], [0], [1], [0, 0, 1, 1], [], []>} : vector<256x128xbf16>, vector<128x128xbf16>, vector<256x128xf32> -> vector<256x128xf32>
      %18 = arith.addf %14, %17 : vector<256x128xf32>
      %c0_12 = arith.constant 0 : index
      %c0_13 = arith.constant 0 : index
      %19 = vector.load %arg6[%c0_12, %c0_13] : memref<1x128xf32, #tpu.memory_space<vmem>>, vector<1x128xf32>
      %20 = vector.broadcast %19 : vector<1x128xf32> to vector<256x128xf32>
      %21 = arith.addf %18, %20 : vector<256x128xf32>
      %cst_14 = arith.constant 0.000000e+00 : f32
      %22 = vector.broadcast %cst_14 : f32 to vector<256x128xf32>
      %23 = arith.maximumf %21, %22 : vector<256x128xf32>
      %24 = arith.truncf %23 : vector<256x128xf32> to vector<256x128xbf16>
      %25 = arith.index_cast %1 : i32 to index
      %c0_15 = arith.constant 0 : index
      %26 = vector.load %arg11[%25, %c0_15] : memref<256x128xbf16, #tpu.memory_space<vmem>>, vector<256x128xbf16>
      tpu.vector_store %arg11[%25, %c0_15], %24 {strides = array<i32>} : memref<256x128xbf16, #tpu.memory_space<vmem>>, vector<256x128xbf16>,
    } else {
    }
    %c1_i32 = arith.constant 1 : i32
    %5 = arith.cmpi eq, %arg0, %c1_i32 : i32
    %6 = arith.extui %5 : i1 to i32
    %c0_i32_1 = arith.constant 0 : i32
    %7 = arith.cmpi ne, %6, %c0_i32_1 : i32
    scf.if %7 {
      %c0 = arith.constant 0 : index
      %c0_2 = arith.constant 0 : index
      %8 = vector.load %arg2[%c0, %c0_2] : memref<256x256xbf16, #tpu.memory_space<vmem>>, vector<256x256xbf16>
      %c0_3 = arith.constant 0 : index
      %c0_4 = arith.constant 0 : index
      %9 = vector.load %arg11[%c0_3, %c0_4] : memref<256x128xbf16, #tpu.memory_space<vmem>>, vector<256x128xbf16>
      %cst = arith.constant dense<0.000000e+00> : vector<256x128xf32>
      %10 = tpu.matmul %8, %9, %cst {dimension_numbers = #tpu.dot_dimension_numbers<[1], [0], [0], [1], [0, 0, 1, 1], [], []>} : vector<256x256xbf16>, vector<256x128xbf16>, vector<256x128xf32> -> vector<256x128xf32>
      %11 = arith.index_cast %1 : i32 to index
      %c0_5 = arith.constant 0 : index
      %12 = vector.load %arg11[%11, %c0_5] : memref<256x128xbf16, #tpu.memory_space<vmem>>, vector<256x128xbf16>
      %c0_6 = arith.constant 0 : index
      %c0_7 = arith.constant 0 : index
      %13 = vector.load %arg7[%c0_6, %c0_7] : memref<128x128xbf16, #tpu.memory_space<vmem>>, vector<128x128xbf16>
      %cst_8 = arith.constant dense<0.000000e+00> : vector<256x128xf32>
      %14 = tpu.matmul %12, %13, %cst_8 {dimension_numbers = #tpu.dot_dimension_numbers<[1], [0], [0], [1], [0, 0, 1, 1], [], []>} : vector<256x128xbf16>, vector<128x128xbf16>, vector<256x128xf32> -> vector<256x128xf32>
      %15 = arith.truncf %10 : vector<256x128xf32> to vector<256x128xbf16>
      %c0_9 = arith.constant 0 : index
      %c0_10 = arith.constant 0 : index
      %16 = vector.load %arg8[%c0_9, %c0_10] : memref<128x128xbf16, #tpu.memory_space<vmem>>, vector<128x128xbf16>
      %cst_11 = arith.constant dense<0.000000e+00> : vector<256x128xf32>
      %17 = tpu.matmul %15, %16, %cst_11 {dimension_numbers = #tpu.dot_dimension_numbers<[1], [0], [0], [1], [0, 0, 1, 1], [], []>} : vector<256x128xbf16>, vector<128x128xbf16>, vector<256x128xf32> -> vector<256x128xf32>
      %18 = arith.addf %14, %17 : vector<256x128xf32>
      %c0_12 = arith.constant 0 : index
      %c0_13 = arith.constant 0 : index
      %19 = vector.load %arg9[%c0_12, %c0_13] : memref<1x128xf32, #tpu.memory_space<vmem>>, vector<1x128xf32>
      %20 = vector.broadcast %19 : vector<1x128xf32> to vector<256x128xf32>
      %21 = arith.addf %18, %20 : vector<256x128xf32>
      %22 = tpu.iota {dimensions = array<i32: 1>} : vector<256x128xi32>
      %c8_i32 = arith.constant 8 : i32
      %23 = vector.broadcast %c8_i32 : i32 to vector<256x128xi32>
      %24 = arith.cmpi slt, %22, %23 : vector<256x128xi32>
      %cst_14 = arith.constant -1.000000e+30 : f32
      %25 = vector.broadcast %cst_14 : f32 to vector<256x128xf32>
      %26 = arith.select %24, %21, %25 : vector<256x128xi1>, vector<256x128xf32>
      %cst_15 = arith.constant dense<0xFF800000> : vector<256xf32>
      %27 = vector.multi_reduction <maximumf>, %26, %cst_15 [1] : vector<256x128xf32> to vector<256xf32>
      %28 = vector.shape_cast %27 : vector<256xf32> to vector<256x1xf32>
      %29 = vector.broadcast %28 : vector<256x1xf32> to vector<256x128xf32>
      %30 = arith.subf %26, %29 : vector<256x128xf32>
      %31 = math.exp %30 : vector<256x128xf32>
      %cst_16 = arith.constant dense<0.000000e+00> : vector<256xf32>
      %32 = vector.multi_reduction <add>, %31, %cst_16 [1] : vector<256x128xf32> to vector<256xf32>
      %33 = vector.shape_cast %32 : vector<256xf32> to vector<256x1xf32>
      %34 = math.log %33 : vector<256x1xf32>
      %35 = vector.broadcast %34 : vector<256x1xf32> to vector<256x128xf32>
      %36 = arith.subf %30, %35 : vector<256x128xf32>
      %c0_17 = arith.constant 0 : index
      %c0_18 = arith.constant 0 : index
      %37 = vector.load %arg10[%c0_17, %c0_18] : memref<256x128xf32, #tpu.memory_space<vmem>>, vector<256x128xf32>
      tpu.vector_store %arg10[%c0_17, %c0_18], %36 {strides = array<i32>} : memref<256x128xf32, #tpu.memory_space<vmem>>, vector<256x128xf32>,
    } else {
    }
    return
  }
  func.func @transform_0(%arg0: i32, %arg1: i32) -> (i32, i32) {
    %c0_i32 = arith.constant 0 : i32
    %c0_i32_0 = arith.constant 0 : i32
    return %arg1, %c0_i32 : i32, i32
  }
  func.func @transform_1(%arg0: i32, %arg1: i32) -> (i32, i32) {
    %c0_i32 = arith.constant 0 : i32
    %c0_i32_0 = arith.constant 0 : i32
    %c0_i32_1 = arith.constant 0 : i32
    return %c0_i32, %c0_i32_0 : i32, i32
  }
  func.func @transform_2(%arg0: i32, %arg1: i32) -> (i32, i32) {
    %c0_i32 = arith.constant 0 : i32
    %c0_i32_0 = arith.constant 0 : i32
    %c0_i32_1 = arith.constant 0 : i32
    return %c0_i32, %c0_i32_0 : i32, i32
  }
  func.func @transform_3(%arg0: i32, %arg1: i32) -> (i32, i32) {
    %c0_i32 = arith.constant 0 : i32
    %c0_i32_0 = arith.constant 0 : i32
    %c0_i32_1 = arith.constant 0 : i32
    return %c0_i32, %c0_i32_0 : i32, i32
  }
  func.func @transform_4(%arg0: i32, %arg1: i32) -> (i32, i32) {
    %c0_i32 = arith.constant 0 : i32
    %c0_i32_0 = arith.constant 0 : i32
    %c0_i32_1 = arith.constant 0 : i32
    return %c0_i32, %c0_i32_0 : i32, i32
  }
  func.func @transform_5(%arg0: i32, %arg1: i32) -> (i32, i32) {
    %c0_i32 = arith.constant 0 : i32
    %c0_i32_0 = arith.constant 0 : i32
    %c0_i32_1 = arith.constant 0 : i32
    return %c0_i32, %c0_i32_0 : i32, i32
  }
  func.func @transform_6(%arg0: i32, %arg1: i32) -> (i32, i32) {
    %c0_i32 = arith.constant 0 : i32
    %c0_i32_0 = arith.constant 0 : i32
    %c0_i32_1 = arith.constant 0 : i32
    return %c0_i32, %c0_i32_0 : i32, i32
  }
  func.func @transform_7(%arg0: i32, %arg1: i32) -> (i32, i32) {
    %c0_i32 = arith.constant 0 : i32
    %c0_i32_0 = arith.constant 0 : i32
    %c0_i32_1 = arith.constant 0 : i32
    return %c0_i32, %c0_i32_0 : i32, i32
  }
  func.func @transform_8(%arg0: i32, %arg1: i32) -> (i32, i32) {
    %c0_i32 = arith.constant 0 : i32
    %c0_i32_0 = arith.constant 0 : i32
    return %arg1, %c0_i32 : i32, i32
  }
}

</mosaic_0001>

<llo_original>
// kernel: tpu_custom_call.1
$region0: #{tpu_custom_call.1}
  #allocation0 [shape = 'u32[]', space=smem, size = 0x4, offset = 0x4, fixed_abs, tag = 'smem constant byte address 0x4 - core index']
  #allocation1 [shape = 'u32[144,128]{1,0:T(1,128)}', space=vmem, size = 0x12000, scoped, tag = 'internal scratch']
  #allocation2 [shape = 'bf16[256,128]{1,0:T(16,128)(2,1)}', space=vmem, size = 0x10000, scoped, tag = 'scratch operand']
  %s0 = inlined_call_operand.hbm [shape: bf16[256,256], index: 0, kind: input, shape index: {}]
  %s1 = inlined_call_operand.hbm [shape: bf16[256,128], index: 1, kind: input, shape index: {}]
  %s2 = inlined_call_operand.hbm [shape: bf16[128,128], index: 2, kind: input, shape index: {}]
  %s3 = inlined_call_operand.hbm [shape: bf16[128,128], index: 3, kind: input, shape index: {}]
  %s4 = inlined_call_operand.vmem [shape: f32[1,128], index: 4, kind: input, shape index: {}]
  %s5 = inlined_call_operand.hbm [shape: bf16[128,128], index: 5, kind: input, shape index: {}]
  %s6 = inlined_call_operand.hbm [shape: bf16[128,128], index: 6, kind: input, shape index: {}]
  %s7 = inlined_call_operand.vmem [shape: f32[1,128], index: 7, kind: input, shape index: {}]
  %s8 = inlined_call_operand.hbm [shape: f32[256,128], index: 8, kind: output, shape index: {}]
  %s9 = sld [smem:[#allocation0]]
  $region97: #{tpu_custom_call.1} parent=0
    _
  %s11 = ssub.s32 1, %s9
  %s12 = scalar_select 0, %s11, %s9
  $region1: #{tpu_custom_call.1} parent=0
    #allocation3 [shape = 'u8[131072]{0}', space=vmem, size = 0x20000, scoped, tag = 'input window, operand 0, single buffered']
    #allocation4 [shape = 's32[2]{0}', space=sflag, size = 0x8, scoped, tag = 'scoped memory for tpu_custom_call.1']
    #allocation5 [shape = 's32[2]{0}', space=sflag, size = 0x8, scoped, tag = 'scoped memory for tpu_custom_call.1']
    #allocation6 [shape = 'u8[65536]{0}', space=vmem, size = 0x10000, scoped, tag = 'input window, operand 1, single buffered']
    #allocation7 [shape = 's32[1]{0}', space=sflag, size = 0x4, scoped, tag = 'scoped memory for tpu_custom_call.1']
    #allocation8 [shape = 'u8[32768]{0}', space=vmem, size = 0x8000, scoped, tag = 'input window, operand 2, single buffered']
    #allocation9 [shape = 'u8[32768]{0}', space=vmem, size = 0x8000, scoped, tag = 'input window, operand 3, single buffered']
    #allocation10 [shape = 's32[1]{0}', space=sflag, size = 0x4, scoped, tag = 'scoped memory for tpu_custom_call.1']
    #allocation11 [shape = 'u8[32768]{0}', space=vmem, size = 0x8000, scoped, tag = 'input window, operand 5, single buffered']
    #allocation12 [shape = 'u8[32768]{0}', space=vmem, size = 0x8000, scoped, tag = 'input window, operand 6, single buffered']
    #allocation13 [shape = 's32[1]{0}', space=sflag, size = 0x4, scoped, tag = 'scoped memory for tpu_custom_call.1']
    #allocation14 [shape = 'u8[131072]{0}', space=vmem, size = 0x20000, scoped, tag = 'output window, operand 0, single buffered']
    %13 = vsyncpa [#allocation4], 0
    %14 = vsyncpa [#allocation7], 0
    %15 = vsyncpa [#allocation10], 0
    %16 = vsyncpa [#allocation13], 0
    %17 = vsyncpa [#allocation5], 0
    loop: start=0, step=1, limit=4
    $region2: #{tpu_custom_call.1} parent=1 // loop_pre_header
      _
    $region3: #{tpu_custom_call.1} parent=1 // loop_header
      %s19 = sphi 0, %s23
      %p20 = scmp.ge.s32.totalorder %s19, 4
      %s26 = sphi 0, %s38
      %s27 = sphi 0, %s34
      %s28 = sphi 0, %s26
      %s29 = sphi 0, %s27
      %s30 = sphi 0, %s28
      %s31 = sphi 0, %s29
      %s41 = sphi 0, %s43
      %s44 = sphi 0, %s41
      %s45 = sphi 0, %s44
      %s61 = sphi 0, %s45
      %s65 = sphi 0, %s65
      %s67 = sphi 0, %s65
      %s68 = sphi 0, %s67
      %s82 = sphi 0, %s68
      %s86 = sphi 0, %s86
      %s88 = sphi 0, %s86
      %s89 = sphi 0, %s88
      %s103 = sphi 0, %s89
      %s107 = sphi 0, %s107
      %s109 = sphi 0, %s107
      %s110 = sphi 0, %s109
      %s124 = sphi 0, %s110
      %s128 = sphi 0, %s128
      %s130 = sphi 0, %s128
      %s131 = sphi 0, %s130
      %s145 = sphi 0, %s131
      %s149 = sphi 0, %s149
      %s151 = sphi 0, %s149
      %s152 = sphi 0, %s151
      %s166 = sphi 0, %s152
      %s170 = sphi 0, %s170
      %s172 = sphi 0, %s170
      %s173 = sphi 0, %s172
      %s187 = sphi 0, %s173
      %s191 = sphi 0, %s191
      %s193 = sphi 0, %s191
      %s194 = sphi 0, %s193
      %s208 = sphi 0, %s194
      %s214 = sphi 0, %s216
      %s217 = sphi 0, %s214
      %s218 = sphi 0, %s217
      %s234 = sphi 0, %s218
    $region4: #{tpu_custom_call.1} parent=1 // loop_header_branch
      %22 = sbr.rel (%p20) target = $region8
    $region5: #{tpu_custom_call.1} parent=1 // loop_body
      %s24 = ssub.s32 %s19, 1
      %s25 = ssub.s32 %s19, 2
      %s32 = sadd.s32 1, %s27
      %p33 = scmp.ge.s32.totalorder %s32, 1
      %s34 = scalar_select %p33, 0, %s32
      %s35 = sadd.s32 1, %s26
      %s36 = scalar_select %p33, %s35, %s26
      %p37 = scmp.ge.s32.totalorder %s36, 2
      %s38 = scalar_select %p37, 0, %s36
      %s39 = ssub.s32 %s27, %s34
      %p40 = scmp.eq.s32.totalorder %s39, 0
      %s42 = sadd.s32 %s41, 1
      %s43 = scalar_select %p40, %s41, %s42
      %p46 = pneg %p40
      %p47 = scmp.eq.s32.totalorder %s19, 1
      %p48 = por %p46, %p47
      %p49 = scmp.ne.s32.totalorder %s41, %s44
      %p50 = scmp.eq.s32.totalorder %s19, 0
      %p51 = por %p49, %p50
      %p52 = scmp.ne.s32.totalorder %s41, %s44
      %p53 = scmp.eq.s32.totalorder %s24, 1
      %p54 = por %p52, %p53
      %p55 = scmp.ne.s32.totalorder %s44, %s45
      %p56 = scmp.eq.s32.totalorder %s24, 0
      %p57 = por %p55, %p56
      %p58 = scmp.ne.s32.totalorder %s44, %s45
      %p59 = scmp.eq.s32.totalorder %s25, 1
      %p60 = por %p58, %p59
      %p62 = scmp.ne.s32.totalorder %s45, %s61
      %p63 = scmp.eq.s32.totalorder %s25, 0
      %p64 = por %p62, %p63
      %s66 = sadd.s32 %s65, 1
      %p69 = scmp.eq.s32.totalorder %s19, 1
      %p70 = scmp.ne.s32.totalorder %s65, %s67
      %p71 = scmp.eq.s32.totalorder %s19, 0
      %p72 = por %p70, %p71
      %p73 = scmp.ne.s32.totalorder %s65, %s67
      %p74 = scmp.eq.s32.totalorder %s24, 1
      %p75 = por %p73, %p74
      %p76 = scmp.ne.s32.totalorder %s67, %s68
      %p77 = scmp.eq.s32.totalorder %s24, 0
      %p78 = por %p76, %p77
      %p79 = scmp.ne.s32.totalorder %s67, %s68
      %p80 = scmp.eq.s32.totalorder %s25, 1
      %p81 = por %p79, %p80
      %p83 = scmp.ne.s32.totalorder %s68, %s82
      %p84 = scmp.eq.s32.totalorder %s25, 0
      %p85 = por %p83, %p84
      %s87 = sadd.s32 %s86, 1
      %p90 = scmp.eq.s32.totalorder %s19, 1
      %p91 = scmp.ne.s32.totalorder %s86, %s88
      %p92 = scmp.eq.s32.totalorder %s19, 0
      %p93 = por %p91, %p92
      %p94 = scmp.ne.s32.totalorder %s86, %s88
      %p95 = scmp.eq.s32.totalorder %s24, 1
      %p96 = por %p94, %p95
      %p97 = scmp.ne.s32.totalorder %s88, %s89
      %p98 = scmp.eq.s32.totalorder %s24, 0
      %p99 = por %p97, %p98
      %p100 = scmp.ne.s32.totalorder %s88, %s89
      %p101 = scmp.eq.s32.totalorder %s25, 1
      %p102 = por %p100, %p101
      %p104 = scmp.ne.s32.totalorder %s89, %s103
      %p105 = scmp.eq.s32.totalorder %s25, 0
      %p106 = por %p104, %p105
      %s108 = sadd.s32 %s107, 1
      %p111 = scmp.eq.s32.totalorder %s19, 1
      %p112 = scmp.ne.s32.totalorder %s107, %s109
      %p113 = scmp.eq.s32.totalorder %s19, 0
      %p114 = por %p112, %p113
      %p115 = scmp.ne.s32.totalorder %s107, %s109
      %p116 = scmp.eq.s32.totalorder %s24, 1
      %p117 = por %p115, %p116
      %p118 = scmp.ne.s32.totalorder %s109, %s110
      %p119 = scmp.eq.s32.totalorder %s24, 0
      %p120 = por %p118, %p119
      %p121 = scmp.ne.s32.totalorder %s109, %s110
      %p122 = scmp.eq.s32.totalorder %s25, 1
      %p123 = por %p121, %p122
      %p125 = scmp.ne.s32.totalorder %s110, %s124
      %p126 = scmp.eq.s32.totalorder %s25, 0
      %p127 = por %p125, %p126
      %s129 = sadd.s32 %s128, 1
      %p132 = scmp.eq.s32.totalorder %s19, 1
      %p133 = scmp.ne.s32.totalorder %s128, %s130
      %p134 = scmp.eq.s32.totalorder %s19, 0
      %p135 = por %p133, %p134
      %p136 = scmp.ne.s32.totalorder %s128, %s130
      %p137 = scmp.eq.s32.totalorder %s24, 1
      %p138 = por %p136, %p137
      %p139 = scmp.ne.s32.totalorder %s130, %s131
      %p140 = scmp.eq.s32.totalorder %s24, 0
      %p141 = por %p139, %p140
      %p142 = scmp.ne.s32.totalorder %s130, %s131
      %p143 = scmp.eq.s32.totalorder %s25, 1
      %p144 = por %p142, %p143
      %p146 = scmp.ne.s32.totalorder %s131, %s145
      %p147 = scmp.eq.s32.totalorder %s25, 0
      %p148 = por %p146, %p147
      %s150 = sadd.s32 %s149, 1
      %p153 = scmp.eq.s32.totalorder %s19, 1
      %p154 = scmp.ne.s32.totalorder %s149, %s151
      %p155 = scmp.eq.s32.totalorder %s19, 0
      %p156 = por %p154, %p155
      %p157 = scmp.ne.s32.totalorder %s149, %s151
      %p158 = scmp.eq.s32.totalorder %s24, 1
      %p159 = por %p157, %p158
      %p160 = scmp.ne.s32.totalorder %s151, %s152
      %p161 = scmp.eq.s32.totalorder %s24, 0
      %p162 = por %p160, %p161
      %p163 = scmp.ne.s32.totalorder %s151, %s152
      %p164 = scmp.eq.s32.totalorder %s25, 1
      %p165 = por %p163, %p164
      %p167 = scmp.ne.s32.totalorder %s152, %s166
      %p168 = scmp.eq.s32.totalorder %s25, 0
      %p169 = por %p167, %p168
      %s171 = sadd.s32 %s170, 1
      %p174 = scmp.eq.s32.totalorder %s19, 1
      %p175 = scmp.ne.s32.totalorder %s170, %s172
      %p176 = scmp.eq.s32.totalorder %s19, 0
      %p177 = por %p175, %p176
      %p178 = scmp.ne.s32.totalorder %s170, %s172
      %p179 = scmp.eq.s32.totalorder %s24, 1
      %p180 = por %p178, %p179
      %p181 = scmp.ne.s32.totalorder %s172, %s173
      %p182 = scmp.eq.s32.totalorder %s24, 0
      %p183 = por %p181, %p182
      %p184 = scmp.ne.s32.totalorder %s172, %s173
      %p185 = scmp.eq.s32.totalorder %s25, 1
      %p186 = por %p184, %p185
      %p188 = scmp.ne.s32.totalorder %s173, %s187
      %p189 = scmp.eq.s32.totalorder %s25, 0
      %p190 = por %p188, %p189
      %s192 = sadd.s32 %s191, 1
      %p195 = scmp.eq.s32.totalorder %s19, 1
      %p196 = scmp.ne.s32.totalorder %s191, %s193
      %p197 = scmp.eq.s32.totalorder %s19, 0
      %p198 = por %p196, %p197
      %p199 = scmp.ne.s32.totalorder %s191, %s193
      %p200 = scmp.eq.s32.totalorder %s24, 1
      %p201 = por %p199, %p200
      %p202 = scmp.ne.s32.totalorder %s193, %s194
      %p203 = scmp.eq.s32.totalorder %s24, 0
      %p204 = por %p202, %p203
      %p205 = scmp.ne.s32.totalorder %s193, %s194
      %p206 = scmp.eq.s32.totalorder %s25, 1
      %p207 = por %p205, %p206
      %p209 = scmp.ne.s32.totalorder %s194, %s208
      %p210 = scmp.eq.s32.totalorder %s25, 0
      %p211 = por %p209, %p210
      %s212 = ssub.s32 %s27, %s34
      %p213 = scmp.eq.s32.totalorder %s212, 0
      %s215 = sadd.s32 %s214, 1
      %s216 = scalar_select %p213, %s214, %s215
      %p219 = pneg %p213
      %p220 = scmp.eq.s32.totalorder %s19, 1
      %p221 = por %p219, %p220
      %p222 = scmp.ne.s32.totalorder %s214, %s217
      %p223 = scmp.eq.s32.totalorder %s19, 0
      %p224 = por %p222, %p223
      %p225 = scmp.ne.s32.totalorder %s214, %s217
      %p226 = scmp.eq.s32.totalorder %s24, 1
      %p227 = por %p225, %p226
      %p228 = scmp.ne.s32.totalorder %s217, %s218
      %p229 = scmp.eq.s32.totalorder %s24, 0
      %p230 = por %p228, %p229
      %p231 = scmp.ne.s32.totalorder %s217, %s218
      %p232 = scmp.eq.s32.totalorder %s25, 1
      %p233 = por %p231, %p232
      %p235 = scmp.ne.s32.totalorder %s218, %s234
      %p236 = scmp.eq.s32.totalorder %s25, 0
      %p237 = por %p235, %p236
      %p238 = scmp.le.s32.totalorder 1, %s19
      %p239 = scmp.lt.s32.totalorder %s19, 3
      %p240 = pnand %p238, %p239
      %p241 = pneg %p240
      // Predicated region
      $region9: #{tpu_custom_call.1} parent=5 // pred_check
        _
      $region10: #{tpu_custom_call.1} parent=5 // pred_check_branch
        %243 = sbr.rel (%p240) target = $region12
      $region11: #{tpu_custom_call.1} parent=5 // pred_region
        %s244 = ssub.s32 %s19, 1
        // Predicated region
        $region13: #{tpu_custom_call.1} parent=11 // pred_check
          %p245 = pneg %p57
        $region14: #{tpu_custom_call.1} parent=11 // pred_check_branch
          %247 = sbr.rel (%p245) target = $region16
        $region15: #{tpu_custom_call.1} parent=11 // pred_region
          %s248 = smul.u32 32, %s29
          %s250 = ssub.s32 4096, 4096
          %251 = vsyncadd [#allocation4], %s250
          %s252 = smul.addr %s248, 2
          %s253 = smul.addr %s252, 64
          %s254 = scalar_lea.hbm %s0, %s253
          %s255 = sshll.u32 [#allocation3], 4
          %s256 = int_to_ptr.vmem [resolvable:$true] %s255
          %261 = dma.hbm_to_vmem [thread:$0]  %s254, 4096, %s256, [#allocation4], 128, 128, 8
        $region16: #{tpu_custom_call.1} parent=11 // pred_fallthru
          _
        // Predicated region
        $region17: #{tpu_custom_call.1} parent=11 // pred_check
          %p262 = pneg %p78
        $region18: #{tpu_custom_call.1} parent=11 // pred_check_branch
          %264 = sbr.rel (%p262) target = $region20
        $region19: #{tpu_custom_call.1} parent=11 // pred_region
          %s266 = ssub.s32 2048, 2048
          %267 = vsyncadd [#allocation7], %s266
          %s268 = sshll.u32 [#allocation6], 4
          %s269 = int_to_ptr.vmem [resolvable:$true] %s268
          %274 = dma.hbm_to_vmem [thread:$0]  %s1, 2048, %s269, [#allocation7], 64, 64, 4
        $region20: #{tpu_custom_call.1} parent=11 // pred_fallthru
          _
        // Predicated region
        $region21: #{tpu_custom_call.1} parent=11 // pred_check
          %p275 = pneg %p99
        $region22: #{tpu_custom_call.1} parent=11 // pred_check_branch
          %277 = sbr.rel (%p275) target = $region24
        $region23: #{tpu_custom_call.1} parent=11 // pred_region
          %s279 = ssub.s32 1024, 1024
          %280 = vsyncadd [#allocation7], %s279
          %s281 = sshll.u32 [#allocation8], 4
          %s282 = int_to_ptr.vmem [resolvable:$true] %s281
          %287 = dma.hbm_to_vmem [thread:$0]  %s2, 1024, %s282, [#allocation7], 64, 64, 4
        $region24: #{tpu_custom_call.1} parent=11 // pred_fallthru
          _
        // Predicated region
        $region25: #{tpu_custom_call.1} parent=11 // pred_check
          %p288 = pneg %p120
        $region26: #{tpu_custom_call.1} parent=11 // pred_check_branch
          %290 = sbr.rel (%p288) target = $region28
        $region27: #{tpu_custom_call.1} parent=11 // pred_region
          %s292 = ssub.s32 1024, 1024
          %293 = vsyncadd [#allocation10], %s292
          %s294 = sshll.u32 [#allocation9], 4
          %s295 = int_to_ptr.vmem [resolvable:$true] %s294
          %300 = dma.hbm_to_vmem [thread:$0]  %s3, 1024, %s295, [#allocation10], 64, 64, 4
        $region28: #{tpu_custom_call.1} parent=11 // pred_fallthru
          _
        // Predicated region
        $region29: #{tpu_custom_call.1} parent=11 // pred_check
          %p301 = pneg %p141
        $region30: #{tpu_custom_call.1} parent=11 // pred_check_branch
          %303 = sbr.rel (%p301) target = $region32
        $region31: #{tpu_custom_call.1} parent=11 // pred_region
          _
        $region32: #{tpu_custom_call.1} parent=11 // pred_fallthru
          _
        // Predicated region
        $region33: #{tpu_custom_call.1} parent=11 // pred_check
          %p304 = pneg %p162
        $region34: #{tpu_custom_call.1} parent=11 // pred_check_branch
          %306 = sbr.rel (%p304) target = $region36
        $region35: #{tpu_custom_call.1} parent=11 // pred_region
          %s308 = ssub.s32 1024, 1024
          %309 = vsyncadd [#allocation10], %s308
          %s310 = sshll.u32 [#allocation11], 4
          %s311 = int_to_ptr.vmem [resolvable:$true] %s310
          %316 = dma.hbm_to_vmem [thread:$0]  %s5, 1024, %s311, [#allocation10], 64, 64, 4
        $region36: #{tpu_custom_call.1} parent=11 // pred_fallthru
          _
        // Predicated region
        $region37: #{tpu_custom_call.1} parent=11 // pred_check
          %p317 = pneg %p183
        $region38: #{tpu_custom_call.1} parent=11 // pred_check_branch
          %319 = sbr.rel (%p317) target = $region40
        $region39: #{tpu_custom_call.1} parent=11 // pred_region
          %s321 = ssub.s32 1024, 1024
          %322 = vsyncadd [#allocation13], %s321
          %s323 = sshll.u32 [#allocation12], 4
          %s324 = int_to_ptr.vmem [resolvable:$true] %s323
          %329 = dma.hbm_to_vmem [thread:$0]  %s6, 1024, %s324, [#allocation13], 64, 64, 4
        $region40: #{tpu_custom_call.1} parent=11 // pred_fallthru
          _
        // Predicated region
        $region41: #{tpu_custom_call.1} parent=11 // pred_check
          %p330 = pneg %p204
        $region42: #{tpu_custom_call.1} parent=11 // pred_check_branch
          %332 = sbr.rel (%p330) target = $region44
        $region43: #{tpu_custom_call.1} parent=11 // pred_region
          _
        $region44: #{tpu_custom_call.1} parent=11 // pred_fallthru
          _
      $region12: #{tpu_custom_call.1} parent=5 // pred_fallthru
        _
      %p333 = scmp.lt.s32.totalorder %s19, 2
      // Predicated region
      $region45: #{tpu_custom_call.1} parent=5 // pred_check
        %p334 = pneg %p333
      $region46: #{tpu_custom_call.1} parent=5 // pred_check_branch
        %336 = sbr.rel (%p334) target = $region48
      $region47: #{tpu_custom_call.1} parent=5 // pred_region
        _
      $region48: #{tpu_custom_call.1} parent=5 // pred_fallthru
        _
      %p337 = scmp.le.s32.totalorder 1, %s19
      %p338 = scmp.lt.s32.totalorder %s19, 3
      %p339 = pnand %p337, %p338
      %p340 = pneg %p339
      // Predicated region
      $region49: #{tpu_custom_call.1} parent=5 // pred_check
        _
      $region50: #{tpu_custom_call.1} parent=5 // pred_check_branch
        %342 = sbr.rel (%p339) target = $region52
      $region51: #{tpu_custom_call.1} parent=5 // pred_region
        %s343 = ssub.s32 %s19, 1
        // Predicated region
        $region53: #{tpu_custom_call.1} parent=51 // pred_check
          %p344 = pneg %p57
        $region54: #{tpu_custom_call.1} parent=51 // pred_check_branch
          %346 = sbr.rel (%p344) target = $region56
        $region55: #{tpu_custom_call.1} parent=51 // pred_region
          %347 = dma.done [#allocation4], 4096
        $region56: #{tpu_custom_call.1} parent=51 // pred_fallthru
          _
        // Predicated region
        $region57: #{tpu_custom_call.1} parent=51 // pred_check
          %p348 = pneg %p78
        $region58: #{tpu_custom_call.1} parent=51 // pred_check_branch
          %350 = sbr.rel (%p348) target = $region60
        $region59: #{tpu_custom_call.1} parent=51 // pred_region
          %351 = dma.done [#allocation7], 2048
        $region60: #{tpu_custom_call.1} parent=51 // pred_fallthru
          _
        // Predicated region
        $region61: #{tpu_custom_call.1} parent=51 // pred_check
          %p352 = pneg %p99
        $region62: #{tpu_custom_call.1} parent=51 // pred_check_branch
          %354 = sbr.rel (%p352) target = $region64
        $region63: #{tpu_custom_call.1} parent=51 // pred_region
          %355 = dma.done [#allocation7], 1024
        $region64: #{tpu_custom_call.1} parent=51 // pred_fallthru
          _
        // Predicated region
        $region65: #{tpu_custom_call.1} parent=51 // pred_check
          %p356 = pneg %p120
        $region66: #{tpu_custom_call.1} parent=51 // pred_check_branch
          %358 = sbr.rel (%p356) target = $region68
        $region67: #{tpu_custom_call.1} parent=51 // pred_region
          %359 = dma.done [#allocation10], 1024
        $region68: #{tpu_custom_call.1} parent=51 // pred_fallthru
          _
        // Predicated region
        $region69: #{tpu_custom_call.1} parent=51 // pred_check
          %p360 = pneg %p162
        $region70: #{tpu_custom_call.1} parent=51 // pred_check_branch
          %362 = sbr.rel (%p360) target = $region72
        $region71: #{tpu_custom_call.1} parent=51 // pred_region
          %363 = dma.done [#allocation10], 1024
        $region72: #{tpu_custom_call.1} parent=51 // pred_fallthru
          _
        // Predicated region
        $region73: #{tpu_custom_call.1} parent=51 // pred_check
          %p364 = pneg %p183
        $region74: #{tpu_custom_call.1} parent=51 // pred_check_branch
          %366 = sbr.rel (%p364) target = $region76
        $region75: #{tpu_custom_call.1} parent=51 // pred_region
          %367 = dma.done [#allocation13], 1024
        $region76: #{tpu_custom_call.1} parent=51 // pred_fallthru
          _
        %p368 = pneg %p57
        %p369 = pneg %p54
        %p370 = pneg %p78
        %p371 = pneg %p75
        %p372 = pneg %p99
        %p373 = pneg %p96
        %p374 = pneg %p120
        %p375 = pneg %p117
        %p376 = pneg %p141
        %p377 = pneg %p138
        %p378 = pneg %p162
        %p379 = pneg %p159
        %p380 = pneg %p183
        %p381 = pneg %p180
        %p382 = pneg %p204
        %p383 = pneg %p201
        %p384 = pneg %p230
        %p385 = pneg %p227
        %s386 = smul.u32 32, %s29
        %s387 = smul.u32 32, %s29
        %s389 = smul.u32 %s29, 256
        %p390 = scmp.eq.s32.totalorder %s28, 0
        // Predicated region
        $region77: #{tpu_custom_call.1} parent=51 // pred_check
          %p391 = pneg %p390
        $region78: #{tpu_custom_call.1} parent=51 // pred_check_branch
          %393 = sbr.rel (%p391) target = $region80
        $region79: #{tpu_custom_call.1} parent=51 // pred_region
          %v394 = vld [vmem:[#allocation3] sm:$0xff]
          %v395 = vld [vmem:[#allocation3 + $0x8] sm:$0xff]
          %v396 = vld [vmem:[#allocation3 + $0x10] sm:$0xff]
          %v397 = vld [vmem:[#allocation3 + $0x18] sm:$0xff]
          %v398 = vld [vmem:[#allocation3 + $0x20] sm:$0xff]
          %v399 = vld [vmem:[#allocation3 + $0x28] sm:$0xff]
          %v400 = vld [vmem:[#allocation3 + $0x30] sm:$0xff]
          %v401 = vld [vmem:[#allocation3 + $0x38] sm:$0xff]
          %v402 = vld [vmem:[#allocation3 + $0x40] sm:$0xff]
          %v403 = vld [vmem:[#allocation3 + $0x48] sm:$0xff]
          %v404 = vld [vmem:[#allocation3 + $0x50] sm:$0xff]
          %v405 = vld [vmem:[#allocation3 + $0x58] sm:$0xff]
          %v406 = vld [vmem:[#allocation3 + $0x60] sm:$0xff]
          %v407 = vld [vmem:[#allocation3 + $0x68] sm:$0xff]
          %v408 = vld [vmem:[#allocation3 + $0x70] sm:$0xff]
          %v409 = vld [vmem:[#allocation3 + $0x78] sm:$0xff]
          %v410 = vld [vmem:[#allocation3 + $0x80] sm:$0xff]
          %v411 = vld [vmem:[#allocation3 + $0x88] sm:$0xff]
          %v412 = vld [vmem:[#allocation3 + $0x90] sm:$0xff]
          %v413 = vld [vmem:[#allocation3 + $0x98] sm:$0xff]
          %v414 = vld [vmem:[#allocation3 + $0xa0] sm:$0xff]
          %v415 = vld [vmem:[#allocation3 + $0xa8] sm:$0xff]
          %v416 = vld [vmem:[#allocation3 + $0xb0] sm:$0xff]
          %v417 = vld [vmem:[#allocation3 + $0xb8] sm:$0xff]
          %v418 = vld [vmem:[#allocation3 + $0xc0] sm:$0xff]
          %v419 = vld [vmem:[#allocation3 + $0xc8] sm:$0xff]
          %v420 = vld [vmem:[#allocation3 + $0xd0] sm:$0xff]
          %v421 = vld [vmem:[#allocation3 + $0xd8] sm:$0xff]
          %v422 = vld [vmem:[#allocation3 + $0xe0] sm:$0xff]
          %v423 = vld [vmem:[#allocation3 + $0xe8] sm:$0xff]
          %v424 = vld [vmem:[#allocation3 + $0xf0] sm:$0xff]
          %v425 = vld [vmem:[#allocation3 + $0xf8] sm:$0xff]
          %v426 = vld [vmem:[#allocation6] sm:$0xf]
          %v427 = vld [vmem:[#allocation6 + $0x4] sm:$0xf]
          %v428 = vld [vmem:[#allocation6 + $0x8] sm:$0xf]
          %v429 = vld [vmem:[#allocation6 + $0xc] sm:$0xf]
          %v430 = vld [vmem:[#allocation6 + $0x10] sm:$0xf]
          %v431 = vld [vmem:[#allocation6 + $0x14] sm:$0xf]
          %v432 = vld [vmem:[#allocation6 + $0x18] sm:$0xf]
          %v433 = vld [vmem:[#allocation6 + $0x1c] sm:$0xf]
          %v434 = vld [vmem:[#allocation6 + $0x20] sm:$0xf]
          %v435 = vld [vmem:[#allocation6 + $0x24] sm:$0xf]
          %v436 = vld [vmem:[#allocation6 + $0x28] sm:$0xf]
          %v437 = vld [vmem:[#allocation6 + $0x2c] sm:$0xf]
          %v438 = vld [vmem:[#allocation6 + $0x30] sm:$0xf]
          %v439 = vld [vmem:[#allocation6 + $0x34] sm:$0xf]
          %v440 = vld [vmem:[#allocation6 + $0x38] sm:$0xf]
          %v441 = vld [vmem:[#allocation6 + $0x3c] sm:$0xf]
          %v442 = vld [vmem:[#allocation6 + $0x40] sm:$0xf]
          %v443 = vld [vmem:[#allocation6 + $0x44] sm:$0xf]
          %v444 = vld [vmem:[#allocation6 + $0x48] sm:$0xf]
          %v445 = vld [vmem:[#allocation6 + $0x4c] sm:$0xf]
          %v446 = vld [vmem:[#allocation6 + $0x50] sm:$0xf]
          %v447 = vld [vmem:[#allocation6 + $0x54] sm:$0xf]
          %v448 = vld [vmem:[#allocation6 + $0x58] sm:$0xf]
          %v449 = vld [vmem:[#allocation6 + $0x5c] sm:$0xf]
          %v450 = vld [vmem:[#allocation6 + $0x60] sm:$0xf]
          %v451 = vld [vmem:[#allocation6 + $0x64] sm:$0xf]
          %v452 = vld [vmem:[#allocation6 + $0x68] sm:$0xf]
          %v453 = vld [vmem:[#allocation6 + $0x6c] sm:$0xf]
          %v454 = vld [vmem:[#allocation6 + $0x70] sm:$0xf]
          %v455 = vld [vmem:[#allocation6 + $0x74] sm:$0xf]
          %v456 = vld [vmem:[#allocation6 + $0x78] sm:$0xf]
          %v457 = vld [vmem:[#allocation6 + $0x7c] sm:$0xf]
          %v490 = vunpack.c.l.b16 %v394
          %v491 = vunpack.c.h.b16 %v394
          %v492 = vunpack.c.l.b16 %v395
          %v493 = vunpack.c.h.b16 %v395
          %v494 = vunpack.c.l.b16 %v396
          %v495 = vunpack.c.h.b16 %v396
          %v496 = vunpack.c.l.b16 %v397
          %v497 = vunpack.c.h.b16 %v397
          %v498 = vunpack.c.l.b16 %v398
          %v499 = vunpack.c.h.b16 %v398
          %v500 = vunpack.c.l.b16 %v399
          %v501 = vunpack.c.h.b16 %v399
          %v502 = vunpack.c.l.b16 %v400
          %v503 = vunpack.c.h.b16 %v400
          %v504 = vunpack.c.l.b16 %v401
          %v505 = vunpack.c.h.b16 %v401
          %v506 = vunpack.c.l.b16 %v402
          %v507 = vunpack.c.h.b16 %v402
          %v508 = vunpack.c.l.b16 %v403
          %v509 = vunpack.c.h.b16 %v403
          %v510 = vunpack.c.l.b16 %v404
          %v511 = vunpack.c.h.b16 %v404
          %v512 = vunpack.c.l.b16 %v405
          %v513 = vunpack.c.h.b16 %v405
          %v514 = vunpack.c.l.b16 %v406
          %v515 = vunpack.c.h.b16 %v406
          %v516 = vunpack.c.l.b16 %v407
          %v517 = vunpack.c.h.b16 %v407
          %v518 = vunpack.c.l.b16 %v408
          %v519 = vunpack.c.h.b16 %v408
          %v520 = vunpack.c.l.b16 %v409
          %v521 = vunpack.c.h.b16 %v409
          %v522 = vunpack.c.l.b16 %v410
          %v523 = vunpack.c.h.b16 %v410
          %v524 = vunpack.c.l.b16 %v411
          %v525 = vunpack.c.h.b16 %v411
          %v526 = vunpack.c.l.b16 %v412
          %v527 = vunpack.c.h.b16 %v412
          %v528 = vunpack.c.l.b16 %v413
          %v529 = vunpack.c.h.b16 %v413
          %v530 = vunpack.c.l.b16 %v414
          %v531 = vunpack.c.h.b16 %v414
          %v532 = vunpack.c.l.b16 %v415
          %v533 = vunpack.c.h.b16 %v415
          %v534 = vunpack.c.l.b16 %v416
          %v535 = vunpack.c.h.b16 %v416
          %v536 = vunpack.c.l.b16 %v417
          %v537 = vunpack.c.h.b16 %v417
          %v538 = vunpack.c.l.b16 %v418
          %v539 = vunpack.c.h.b16 %v418
          %v540 = vunpack.c.l.b16 %v419
          %v541 = vunpack.c.h.b16 %v419
          %v542 = vunpack.c.l.b16 %v420
          %v543 = vunpack.c.h.b16 %v420
          %v544 = vunpack.c.l.b16 %v421
          %v545 = vunpack.c.h.b16 %v421
          %v546 = vunpack.c.l.b16 %v422
          %v547 = vunpack.c.h.b16 %v422
          %v548 = vunpack.c.l.b16 %v423
          %v549 = vunpack.c.h.b16 %v423
          %v550 = vunpack.c.l.b16 %v424
          %v551 = vunpack.c.h.b16 %v424
          %v552 = vunpack.c.l.b16 %v425
          %v553 = vunpack.c.h.b16 %v425
          %v554 = vpack.c.b16 %v492, %v490
          %v555 = vpack.c.b16 %v493, %v491
          %v556 = vpack.c.b16 %v496, %v494
          %v557 = vpack.c.b16 %v497, %v495
          %v558 = vpack.c.b16 %v500, %v498
          %v559 = vpack.c.b16 %v501, %v499
          %v560 = vpack.c.b16 %v504, %v502
          %v561 = vpack.c.b16 %v505, %v503
          %v562 = vpack.c.b16 %v508, %v506
          %v563 = vpack.c.b16 %v509, %v507
          %v564 = vpack.c.b16 %v512, %v510
          %v565 = vpack.c.b16 %v513, %v511
          %v566 = vpack.c.b16 %v516, %v514
          %v567 = vpack.c.b16 %v517, %v515
          %v568 = vpack.c.b16 %v520, %v518
          %v569 = vpack.c.b16 %v521, %v519
          %v570 = vpack.c.b16 %v524, %v522
          %v571 = vpack.c.b16 %v525, %v523
          %v572 = vpack.c.b16 %v528, %v526
          %v573 = vpack.c.b16 %v529, %v527
          %v574 = vpack.c.b16 %v532, %v530
          %v575 = vpack.c.b16 %v533, %v531
          %v576 = vpack.c.b16 %v536, %v534
          %v577 = vpack.c.b16 %v537, %v535
          %v578 = vpack.c.b16 %v540, %v538
          %v579 = vpack.c.b16 %v541, %v539
          %v580 = vpack.c.b16 %v544, %v542
          %v581 = vpack.c.b16 %v545, %v543
          %v582 = vpack.c.b16 %v548, %v546
          %v583 = vpack.c.b16 %v549, %v547
          %v584 = vpack.c.b16 %v552, %v550
          %v585 = vpack.c.b16 %v553, %v551
          %v650 = vunpack.c.l.b16 %v426
          %v651 = vunpack.c.l.b16 %v427
          %v652 = vunpack.c.l.b16 %v428
          %v653 = vunpack.c.l.b16 %v429
          %v654 = vunpack.c.l.b16 %v430
          %v655 = vunpack.c.l.b16 %v431
          %v656 = vunpack.c.l.b16 %v432
          %v657 = vunpack.c.l.b16 %v433
          %v658 = vunpack.c.l.b16 %v434
          %v659 = vunpack.c.l.b16 %v435
          %v660 = vunpack.c.l.b16 %v436
          %v661 = vunpack.c.l.b16 %v437
          %v662 = vunpack.c.l.b16 %v438
          %v663 = vunpack.c.l.b16 %v439
          %v664 = vunpack.c.l.b16 %v440
          %v665 = vunpack.c.l.b16 %v441
          %v666 = vunpack.c.l.b16 %v442
          %v667 = vunpack.c.l.b16 %v443
          %v668 = vunpack.c.l.b16 %v444
          %v669 = vunpack.c.l.b16 %v445
          %v670 = vunpack.c.l.b16 %v446
          %v671 = vunpack.c.l.b16 %v447
          %v672 = vunpack.c.l.b16 %v448
          %v673 = vunpack.c.l.b16 %v449
          %v674 = vunpack.c.l.b16 %v450
          %v675 = vunpack.c.l.b16 %v451
          %v676 = vunpack.c.l.b16 %v452
          %v677 = vunpack.c.l.b16 %v453
          %v678 = vunpack.c.l.b16 %v454
          %v679 = vunpack.c.l.b16 %v455
          %v680 = vunpack.c.l.b16 %v456
          %v681 = vunpack.c.l.b16 %v457
          %v682 = vpack.c.b16 %v651, %v650
          %v683 = vpack.c.b16 %v653, %v652
          %v684 = vpack.c.b16 %v655, %v654
          %v685 = vpack.c.b16 %v657, %v656
          %v686 = vpack.c.b16 %v659, %v658
          %v687 = vpack.c.b16 %v661, %v660
          %v688 = vpack.c.b16 %v663, %v662
          %v689 = vpack.c.b16 %v665, %v664
          %v690 = vpack.c.b16 %v667, %v666
          %v691 = vpack.c.b16 %v669, %v668
          %v692 = vpack.c.b16 %v671, %v670
          %v693 = vpack.c.b16 %v673, %v672
          %v694 = vpack.c.b16 %v675, %v674
          %v695 = vpack.c.b16 %v677, %v676
          %v696 = vpack.c.b16 %v679, %v678
          %v697 = vpack.c.b16 %v681, %v680
          %714 = vmatprep.subr.bf16.mxu0 0
          %715 = vmatpush1.bf16.msra.mxu0 %v682
          %716 = vmatprep.subr.bf16.mxu0 0
          %717 = vmatpush1.bf16.msra.mxu0 %v683
          %718 = vmatprep.subr.bf16.mxu0 0
          %719 = vmatpush1.bf16.msra.mxu0 %v684
          %720 = vmatprep.subr.bf16.mxu0 0
          %721 = vmatpush1.bf16.msra.mxu0 %v685
          %722 = vmatprep.subr.bf16.mxu0 0
          %723 = vmatpush1.bf16.msra.mxu0 %v686
          %724 = vmatprep.subr.bf16.mxu0 0
          %725 = vmatpush1.bf16.msra.mxu0 %v687
          %726 = vmatprep.subr.bf16.mxu0 0
          %727 = vmatpush1.bf16.msra.mxu0 %v688
          %728 = vmatprep.subr.bf16.mxu0 0
          %729 = vmatpush1.bf16.msra.mxu0 %v689
          %730 = vmatprep.subr.bf16.mxu0 0
          %731 = vmatpush1.bf16.msra.mxu0 %v690
          %732 = vmatprep.subr.bf16.mxu0 0
          %733 = vmatpush1.bf16.msra.mxu0 %v691
          %734 = vmatprep.subr.bf16.mxu0 0
          %735 = vmatpush1.bf16.msra.mxu0 %v692
          %736 = vmatprep.subr.bf16.mxu0 0
          %737 = vmatpush1.bf16.msra.mxu0 %v693
          %738 = vmatprep.subr.bf16.mxu0 0
          %739 = vmatpush1.bf16.msra.mxu0 %v694
          %740 = vmatprep.subr.bf16.mxu0 0
          %741 = vmatpush1.bf16.msra.mxu0 %v695
          %742 = vmatprep.subr.bf16.mxu0 0
          %743 = vmatpush1.bf16.msra.mxu0 %v696
          %744 = vmatprep.subr.bf16.mxu0 0
          %745 = vmatpush1.bf16.msra.mxu0 %v697
          %746 = vmatprep.mubr.bf16.mxu0 %v555
          %747 = vmatmul.mubr.bf16.gmra.mrb[0].mxu0 %v554
          %v748 = vpop.f32.mrb[0].mxu0
          %v749 = vadd.f32 0.0, %v748
          %v750 = vpop.f32.mrb[0].mxu0
          %v751 = vpop.f32.mrb[0].mxu0
          %v752 = vadd.f32 0.0, %v751
          %v753 = vpop.f32.mrb[0].mxu0
          %754 = vmatprep.mubr.bf16.mxu0 %v557
          %755 = vmatmul.mubr.bf16.gmra.mrb[0].mxu0 %v556
          %v756 = vpop.f32.mrb[0].mxu0
          %v757 = vadd.f32 0.0, %v756
          %v758 = vpop.f32.mrb[0].mxu0
          %v759 = vpop.f32.mrb[0].mxu0
          %v760 = vadd.f32 0.0, %v759
          %v761 = vpop.f32.mrb[0].mxu0
          %762 = vmatprep.mubr.bf16.mxu0 %v559
          %763 = vmatmul.mubr.bf16.gmra.mrb[0].mxu0 %v558
          %v764 = vpop.f32.mrb[0].mxu0
          %v765 = vadd.f32 0.0, %v764
          %v766 = vpop.f32.mrb[0].mxu0
          %v767 = vpop.f32.mrb[0].mxu0
          %v768 = vadd.f32 0.0, %v767
          %v769 = vpop.f32.mrb[0].mxu0
          %770 = vmatprep.mubr.bf16.mxu0 %v561
          %771 = vmatmul.mubr.bf16.gmra.mrb[0].mxu0 %v560
          %v772 = vpop.f32.mrb[0].mxu0
          %v773 = vadd.f32 0.0, %v772
          %v774 = vpop.f32.mrb[0].mxu0
          %v775 = vpop.f32.mrb[0].mxu0
          %v776 = vadd.f32 0.0, %v775
          %v777 = vpop.f32.mrb[0].mxu0
          %778 = vmatprep.mubr.bf16.mxu0 %v563
          %779 = vmatmul.mubr.bf16.gmra.mrb[0].mxu0 %v562
          %v780 = vpop.f32.mrb[0].mxu0
          %v781 = vadd.f32 0.0, %v780
          %v782 = vpop.f32.mrb[0].mxu0
          %v783 = vpop.f32.mrb[0].mxu0
          %v784 = vadd.f32 0.0, %v783
          %v785 = vpop.f32.mrb[0].mxu0
          %786 = vmatprep.mubr.bf16.mxu0 %v565
          %787 = vmatmul.mubr.bf16.gmra.mrb[0].mxu0 %v564
          %v788 = vpop.f32.mrb[0].mxu0
          %v789 = vadd.f32 0.0, %v788
          %v790 = vpop.f32.mrb[0].mxu0
          %v791 = vpop.f32.mrb[0].mxu0
          %v792 = vadd.f32 0.0, %v791
          %v793 = vpop.f32.mrb[0].mxu0
          %794 = vmatprep.mubr.bf16.mxu0 %v567
          %795 = vmatmul.mubr.bf16.gmra.mrb[0].mxu0 %v566
          %v796 = vpop.f32.mrb[0].mxu0
          %v797 = vadd.f32 0.0, %v796
          %v798 = vpop.f32.mrb[0].mxu0
          %v799 = vpop.f32.mrb[0].mxu0
          %v800 = vadd.f32 0.0, %v799
          %v801 = vpop.f32.mrb[0].mxu0
          %802 = vmatprep.mubr.bf16.mxu0 %v569
          %803 = vmatmul.mubr.bf16.gmra.mrb[0].mxu0 %v568
          %v804 = vpop.f32.mrb[0].mxu0
          %v805 = vadd.f32 0.0, %v804
          %v806 = vpop.f32.mrb[0].mxu0
          %v807 = vpop.f32.mrb[0].mxu0
          %v808 = vadd.f32 0.0, %v807
          %v809 = vpop.f32.mrb[0].mxu0
          %810 = vmatprep.mubr.bf16.mxu0 %v571
          %811 = vmatmul.mubr.bf16.gmra.mrb[0].mxu0 %v570
          %v812 = vpop.f32.mrb[0].mxu0
          %v813 = vadd.f32 0.0, %v812
          %v814 = vpop.f32.mrb[0].mxu0
          %v815 = vpop.f32.mrb[0].mxu0
          %v816 = vadd.f32 0.0, %v815
          %v817 = vpop.f32.mrb[0].mxu0
          %818 = vmatprep.mubr.bf16.mxu0 %v573
          %819 = vmatmul.mubr.bf16.gmra.mrb[0].mxu0 %v572
          %v820 = vpop.f32.mrb[0].mxu0
          %v821 = vadd.f32 0.0, %v820
          %v822 = vpop.f32.mrb[0].mxu0
          %v823 = vpop.f32.mrb[0].mxu0
          %v824 = vadd.f32 0.0, %v823
          %v825 = vpop.f32.mrb[0].mxu0
          %826 = vmatprep.mubr.bf16.mxu0 %v575
          %827 = vmatmul.mubr.bf16.gmra.mrb[0].mxu0 %v574
          %v828 = vpop.f32.mrb[0].mxu0
          %v829 = vadd.f32 0.0, %v828
          %v830 = vpop.f32.mrb[0].mxu0
          %v831 = vpop.f32.mrb[0].mxu0
          %v832 = vadd.f32 0.0, %v831
          %v833 = vpop.f32.mrb[0].mxu0
          %834 = vmatprep.mubr.bf16.mxu0 %v577
          %835 = vmatmul.mubr.bf16.gmra.mrb[0].mxu0 %v576
          %v836 = vpop.f32.mrb[0].mxu0
          %v837 = vadd.f32 0.0, %v836
          %v838 = vpop.f32.mrb[0].mxu0
          %v839 = vpop.f32.mrb[0].mxu0
          %v840 = vadd.f32 0.0, %v839
          %v841 = vpop.f32.mrb[0].mxu0
          %842 = vmatprep.mubr.bf16.mxu0 %v579
          %843 = vmatmul.mubr.bf16.gmra.mrb[0].mxu0 %v578
          %v844 = vpop.f32.mrb[0].mxu0
          %v845 = vadd.f32 0.0, %v844
          %v846 = vpop.f32.mrb[0].mxu0
          %v847 = vpop.f32.mrb[0].mxu0
          %v848 = vadd.f32 0.0, %v847
          %v849 = vpop.f32.mrb[0].mxu0
          %850 = vmatprep.mubr.bf16.mxu0 %v581
          %851 = vmatmul.mubr.bf16.gmra.mrb[0].mxu0 %v580
          %v852 = vpop.f32.mrb[0].mxu0
          %v853 = vadd.f32 0.0, %v852
          %v854 = vpop.f32.mrb[0].mxu0
          %v855 = vpop.f32.mrb[0].mxu0
          %v856 = vadd.f32 0.0, %v855
          %v857 = vpop.f32.mrb[0].mxu0
          %858 = vmatprep.mubr.bf16.mxu0 %v583
          %859 = vmatmul.mubr.bf16.gmra.mrb[0].mxu0 %v582
          %v860 = vpop.f32.mrb[0].mxu0
          %v861 = vadd.f32 0.0, %v860
          %v862 = vpop.f32.mrb[0].mxu0
          %v863 = vpop.f32.mrb[0].mxu0
          %v864 = vadd.f32 0.0, %v863
          %v865 = vpop.f32.mrb[0].mxu0
          %866 = vmatprep.mubr.bf16.mxu0 %v585
          %867 = vmatmul.mubr.bf16.gmra.mrb[0].mxu0 %v584
          %v868 = vpop.f32.mrb[0].mxu0
          %v869 = vadd.f32 0.0, %v868
          %v870 = vpop.f32.mrb[0].mxu0
          %v871 = vpop.f32.mrb[0].mxu0
          %v872 = vadd.f32 0.0, %v871
          %v873 = vpop.f32.mrb[0].mxu0
          %874 = vdwg.mxu0
          %s875 = sshra.s32 %s389, 3
          %s876 = sand.u32 %s389, 7
          %s877 = smul.addr %s875, 4
          %s878 = scalar_lea.vmem [#allocation6], %s877
          %v879 = vld [vmem:[%s878] sm:$0xf]
          %v880 = vld [vmem:[%s878 + $0x4] sm:$0xf]
          %v881 = vld [vmem:[%s878 + $0x8] sm:$0xf]
          %v882 = vld [vmem:[%s878 + $0xc] sm:$0xf]
          %v883 = vld [vmem:[%s878 + $0x10] sm:$0xf]
          %v884 = vld [vmem:[%s878 + $0x14] sm:$0xf]
          %v885 = vld [vmem:[%s878 + $0x18] sm:$0xf]
          %v886 = vld [vmem:[%s878 + $0x1c] sm:$0xf]
          %v887 = vld [vmem:[%s878 + $0x20] sm:$0xf]
          %v888 = vld [vmem:[%s878 + $0x24] sm:$0xf]
          %v889 = vld [vmem:[%s878 + $0x28] sm:$0xf]
          %v890 = vld [vmem:[%s878 + $0x2c] sm:$0xf]
          %v891 = vld [vmem:[%s878 + $0x30] sm:$0xf]
          %v892 = vld [vmem:[%s878 + $0x34] sm:$0xf]
          %v893 = vld [vmem:[%s878 + $0x38] sm:$0xf]
          %v894 = vld [vmem:[%s878 + $0x3c] sm:$0xf]
          %v895 = vld [vmem:[%s878 + $0x40] sm:$0xf]
          %v896 = vld [vmem:[%s878 + $0x44] sm:$0xf]
          %v897 = vld [vmem:[%s878 + $0x48] sm:$0xf]
          %v898 = vld [vmem:[%s878 + $0x4c] sm:$0xf]
          %v899 = vld [vmem:[%s878 + $0x50] sm:$0xf]
          %v900 = vld [vmem:[%s878 + $0x54] sm:$0xf]
          %v901 = vld [vmem:[%s878 + $0x58] sm:$0xf]
          %v902 = vld [vmem:[%s878 + $0x5c] sm:$0xf]
          %v903 = vld [vmem:[%s878 + $0x60] sm:$0xf]
          %v904 = vld [vmem:[%s878 + $0x64] sm:$0xf]
          %v905 = vld [vmem:[%s878 + $0x68] sm:$0xf]
          %v906 = vld [vmem:[%s878 + $0x6c] sm:$0xf]
          %v907 = vld [vmem:[%s878 + $0x70] sm:$0xf]
          %v908 = vld [vmem:[%s878 + $0x74] sm:$0xf]
          %v909 = vld [vmem:[%s878 + $0x78] sm:$0xf]
          %v910 = vld [vmem:[%s878 + $0x7c] sm:$0xf]
          %v911 = vld [vmem:[#allocation8] sm:$0xf]
          %v912 = vld [vmem:[#allocation8 + $0x4] sm:$0xf]
          %v913 = vld [vmem:[#allocation8 + $0x8] sm:$0xf]
          %v914 = vld [vmem:[#allocation8 + $0xc] sm:$0xf]
          %v915 = vld [vmem:[#allocation8 + $0x10] sm:$0xf]
          %v916 = vld [vmem:[#allocation8 + $0x14] sm:$0xf]
          %v917 = vld [vmem:[#allocation8 + $0x18] sm:$0xf]
          %v918 = vld [vmem:[#allocation8 + $0x1c] sm:$0xf]
          %v919 = vld [vmem:[#allocation8 + $0x20] sm:$0xf]
          %v920 = vld [vmem:[#allocation8 + $0x24] sm:$0xf]
          %v921 = vld [vmem:[#allocation8 + $0x28] sm:$0xf]
          %v922 = vld [vmem:[#allocation8 + $0x2c] sm:$0xf]
          %v923 = vld [vmem:[#allocation8 + $0x30] sm:$0xf]
          %v924 = vld [vmem:[#allocation8 + $0x34] sm:$0xf]
          %v925 = vld [vmem:[#allocation8 + $0x38] sm:$0xf]
          %v926 = vld [vmem:[#allocation8 + $0x3c] sm:$0xf]
          %v927 = vpack.c.bf16 %v752, %v749
          %v928 = vpack.c.bf16 %v760, %v757
          %v929 = vpack.c.bf16 %v768, %v765
          %v930 = vpack.c.bf16 %v776, %v773
          %v931 = vpack.c.bf16 %v784, %v781
          %v932 = vpack.c.bf16 %v792, %v789
          %v933 = vpack.c.bf16 %v800, %v797
          %v934 = vpack.c.bf16 %v808, %v805
          %v935 = vpack.c.bf16 %v816, %v813
          %v936 = vpack.c.bf16 %v824, %v821
          %v937 = vpack.c.bf16 %v832, %v829
          %v938 = vpack.c.bf16 %v840, %v837
          %v939 = vpack.c.bf16 %v848, %v845
          %v940 = vpack.c.bf16 %v856, %v853
          %v941 = vpack.c.bf16 %v864, %v861
          %v942 = vpack.c.bf16 %v872, %v869
          %v943 = vld [vmem:[#allocation9] sm:$0xf]
          %v944 = vld [vmem:[#allocation9 + $0x4] sm:$0xf]
          %v945 = vld [vmem:[#allocation9 + $0x8] sm:$0xf]
          %v946 = vld [vmem:[#allocation9 + $0xc] sm:$0xf]
          %v947 = vld [vmem:[#allocation9 + $0x10] sm:$0xf]
          %v948 = vld [vmem:[#allocation9 + $0x14] sm:$0xf]
          %v949 = vld [vmem:[#allocation9 + $0x18] sm:$0xf]
          %v950 = vld [vmem:[#allocation9 + $0x1c] sm:$0xf]
          %v951 = vld [vmem:[#allocation9 + $0x20] sm:$0xf]
          %v952 = vld [vmem:[#allocation9 + $0x24] sm:$0xf]
          %v953 = vld [vmem:[#allocation9 + $0x28] sm:$0xf]
          %v954 = vld [vmem:[#allocation9 + $0x2c] sm:$0xf]
          %v955 = vld [vmem:[#allocation9 + $0x30] sm:$0xf]
          %v956 = vld [vmem:[#allocation9 + $0x34] sm:$0xf]
          %v957 = vld [vmem:[#allocation9 + $0x38] sm:$0xf]
          %v958 = vld [vmem:[#allocation9 + $0x3c] sm:$0xf]
          %v975 = vunpack.c.l.b16 %v943
          %v976 = vunpack.c.l.b16 %v944
          %v977 = vunpack.c.l.b16 %v945
          %v978 = vunpack.c.l.b16 %v946
          %v979 = vunpack.c.l.b16 %v947
          %v980 = vunpack.c.l.b16 %v948
          %v981 = vunpack.c.l.b16 %v949
          %v982 = vunpack.c.l.b16 %v950
          %v983 = vunpack.c.l.b16 %v951
          %v984 = vunpack.c.l.b16 %v952
          %v985 = vunpack.c.l.b16 %v953
          %v986 = vunpack.c.l.b16 %v954
          %v987 = vunpack.c.l.b16 %v955
          %v988 = vunpack.c.l.b16 %v956
          %v989 = vunpack.c.l.b16 %v957
          %v990 = vunpack.c.l.b16 %v958
          %v991 = vpack.c.b16 %v976, %v975
          %v992 = vpack.c.b16 %v978, %v977
          %v993 = vpack.c.b16 %v980, %v979
          %v994 = vpack.c.b16 %v982, %v981
          %v995 = vpack.c.b16 %v984, %v983
          %v996 = vpack.c.b16 %v986, %v985
          %v997 = vpack.c.b16 %v988, %v987
          %v998 = vpack.c.b16 %v990, %v989
          %1007 = vmatprep.subr.bf16.mxu0 0
          %1008 = vmatpush1.bf16.msra.mxu0 %v991
          %1009 = vmatprep.subr.bf16.mxu0 0
          %1010 = vmatpush1.bf16.msra.mxu0 %v992
          %1011 = vmatprep.subr.bf16.mxu0 0
          %1012 = vmatpush1.bf16.msra.mxu0 %v993
          %1013 = vmatprep.subr.bf16.mxu0 0
          %1014 = vmatpush1.bf16.msra.mxu0 %v994
          %1015 = vmatprep.subr.bf16.mxu0 0
          %1016 = vmatpush1.bf16.msra.mxu0 %v995
          %1017 = vmatprep.subr.bf16.mxu0 0
          %1018 = vmatpush1.bf16.msra.mxu0 %v996
          %1019 = vmatprep.subr.bf16.mxu0 0
          %1020 = vmatpush1.bf16.msra.mxu0 %v997
          %1021 = vmatprep.subr.bf16.mxu0 0
          %1022 = vmatpush1.bf16.msra.mxu0 %v998
          %1023 = vmatprep.subr.bf16.mxu0 0
          %1024 = vmatpush1.bf16.msra.mxu0 0
          %1025 = vmatprep.subr.bf16.mxu0 0
          %1026 = vmatpush1.bf16.msra.mxu0 0
          %1027 = vmatprep.subr.bf16.mxu0 0
          %1028 = vmatpush1.bf16.msra.mxu0 0
          %1029 = vmatprep.subr.bf16.mxu0 0
          %1030 = vmatpush1.bf16.msra.mxu0 0
          %1031 = vmatprep.subr.bf16.mxu0 0
          %1032 = vmatpush1.bf16.msra.mxu0 0
          %1033 = vmatprep.subr.bf16.mxu0 0
          %1034 = vmatpush1.bf16.msra.mxu0 0
          %1035 = vmatprep.subr.bf16.mxu0 0
          %1036 = vmatpush1.bf16.msra.mxu0 0
          %1037 = vmatprep.subr.bf16.mxu0 0
          %1038 = vmatpush1.bf16.msra.mxu0 0
          %1039 = vmatprep.mubr.bf16.mxu0 0
          %1040 = vmatmul.mubr.bf16.gmra.mrb[0].mxu0 %v927
          %v1041 = vpop.f32.mrb[0].mxu0
          %v1042 = vadd.f32 0.0, %v1041
          %v1043 = vpop.f32.mrb[0].mxu0
          %v1044 = vpop.f32.mrb[0].mxu0
          %v1045 = vadd.f32 0.0, %v1044
          %v1046 = vpop.f32.mrb[0].mxu0
          %1047 = vmatprep.mubr.bf16.mxu0 0
          %1048 = vmatmul.mubr.bf16.gmra.mrb[0].mxu0 %v928
          %v1049 = vpop.f32.mrb[0].mxu0
          %v1050 = vadd.f32 0.0, %v1049
          %v1051 = vpop.f32.mrb[0].mxu0
          %v1052 = vpop.f32.mrb[0].mxu0
          %v1053 = vadd.f32 0.0, %v1052
          %v1054 = vpop.f32.mrb[0].mxu0
          %1055 = vmatprep.mubr.bf16.mxu0 0
          %1056 = vmatmul.mubr.bf16.gmra.mrb[0].mxu0 %v929
          %v1057 = vpop.f32.mrb[0].mxu0
          %v1058 = vadd.f32 0.0, %v1057
          %v1059 = vpop.f32.mrb[0].mxu0
          %v1060 = vpop.f32.mrb[0].mxu0
          %v1061 = vadd.f32 0.0, %v1060
          %v1062 = vpop.f32.mrb[0].mxu0
          %1063 = vmatprep.mubr.bf16.mxu0 0
          %1064 = vmatmul.mubr.bf16.gmra.mrb[0].mxu0 %v930
          %v1065 = vpop.f32.mrb[0].mxu0
          %v1066 = vadd.f32 0.0, %v1065
          %v1067 = vpop.f32.mrb[0].mxu0
          %v1068 = vpop.f32.mrb[0].mxu0
          %v1069 = vadd.f32 0.0, %v1068
          %v1070 = vpop.f32.mrb[0].mxu0
          %1071 = vmatprep.mubr.bf16.mxu0 0
          %1072 = vmatmul.mubr.bf16.gmra.mrb[0].mxu0 %v931
          %v1073 = vpop.f32.mrb[0].mxu0
          %v1074 = vadd.f32 0.0, %v1073
          %v1075 = vpop.f32.mrb[0].mxu0
          %v1076 = vpop.f32.mrb[0].mxu0
          %v1077 = vadd.f32 0.0, %v1076
          %v1078 = vpop.f32.mrb[0].mxu0
          %1079 = vmatprep.mubr.bf16.mxu0 0
          %1080 = vmatmul.mubr.bf16.gmra.mrb[0].mxu0 %v932
          %v1081 = vpop.f32.mrb[0].mxu0
          %v1082 = vadd.f32 0.0, %v1081
          %v1083 = vpop.f32.mrb[0].mxu0
          %v1084 = vpop.f32.mrb[0].mxu0
          %v1085 = vadd.f32 0.0, %v1084
          %v1086 = vpop.f32.mrb[0].mxu0
          %1087 = vmatprep.mubr.bf16.mxu0 0
          %1088 = vmatmul.mubr.bf16.gmra.mrb[0].mxu0 %v933
          %v1089 = vpop.f32.mrb[0].mxu0
          %v1090 = vadd.f32 0.0, %v1089
          %v1091 = vpop.f32.mrb[0].mxu0
          %v1092 = vpop.f32.mrb[0].mxu0
          %v1093 = vadd.f32 0.0, %v1092
          %v1094 = vpop.f32.mrb[0].mxu0
          %1095 = vmatprep.mubr.bf16.mxu0 0
          %1096 = vmatmul.mubr.bf16.gmra.mrb[0].mxu0 %v934
          %v1097 = vpop.f32.mrb[0].mxu0
          %v1098 = vadd.f32 0.0, %v1097
          %v1099 = vpop.f32.mrb[0].mxu0
          %v1100 = vpop.f32.mrb[0].mxu0
          %v1101 = vadd.f32 0.0, %v1100
          %v1102 = vpop.f32.mrb[0].mxu0
          %1103 = vmatprep.mubr.bf16.mxu0 0
          %1104 = vmatmul.mubr.bf16.gmra.mrb[0].mxu0 %v935
          %v1105 = vpop.f32.mrb[0].mxu0
          %v1106 = vadd.f32 0.0, %v1105
          %v1107 = vpop.f32.mrb[0].mxu0
          %v1108 = vpop.f32.mrb[0].mxu0
          %v1109 = vadd.f32 0.0, %v1108
          %v1110 = vpop.f32.mrb[0].mxu0
          %1111 = vmatprep.mubr.bf16.mxu0 0
          %1112 = vmatmul.mubr.bf16.gmra.mrb[0].mxu0 %v936
          %v1113 = vpop.f32.mrb[0].mxu0
          %v1114 = vadd.f32 0.0, %v1113
          %v1115 = vpop.f32.mrb[0].mxu0
          %v1116 = vpop.f32.mrb[0].mxu0
          %v1117 = vadd.f32 0.0, %v1116
          %v1118 = vpop.f32.mrb[0].mxu0
          %1119 = vmatprep.mubr.bf16.mxu0 0
          %1120 = vmatmul.mubr.bf16.gmra.mrb[0].mxu0 %v937
          %v1121 = vpop.f32.mrb[0].mxu0
          %v1122 = vadd.f32 0.0, %v1121
          %v1123 = vpop.f32.mrb[0].mxu0
          %v1124 = vpop.f32.mrb[0].mxu0
          %v1125 = vadd.f32 0.0, %v1124
          %v1126 = vpop.f32.mrb[0].mxu0
          %1127 = vmatprep.mubr.bf16.mxu0 0
          %1128 = vmatmul.mubr.bf16.gmra.mrb[0].mxu0 %v938
          %v1129 = vpop.f32.mrb[0].mxu0
          %v1130 = vadd.f32 0.0, %v1129
          %v1131 = vpop.f32.mrb[0].mxu0
          %v1132 = vpop.f32.mrb[0].mxu0
          %v1133 = vadd.f32 0.0, %v1132
          %v1134 = vpop.f32.mrb[0].mxu0
          %1135 = vmatprep.mubr.bf16.mxu0 0
          %1136 = vmatmul.mubr.bf16.gmra.mrb[0].mxu0 %v939
          %v1137 = vpop.f32.mrb[0].mxu0
          %v1138 = vadd.f32 0.0, %v1137
          %v1139 = vpop.f32.mrb[0].mxu0
          %v1140 = vpop.f32.mrb[0].mxu0
          %v1141 = vadd.f32 0.0, %v1140
          %v1142 = vpop.f32.mrb[0].mxu0
          %1143 = vmatprep.mubr.bf16.mxu0 0
          %1144 = vmatmul.mubr.bf16.gmra.mrb[0].mxu0 %v940
          %v1145 = vpop.f32.mrb[0].mxu0
          %v1146 = vadd.f32 0.0, %v1145
          %v1147 = vpop.f32.mrb[0].mxu0
          %v1148 = vpop.f32.mrb[0].mxu0
          %v1149 = vadd.f32 0.0, %v1148
          %v1150 = vpop.f32.mrb[0].mxu0
          %1151 = vmatprep.mubr.bf16.mxu0 0
          %1152 = vmatmul.mubr.bf16.gmra.mrb[0].mxu0 %v941
          %v1153 = vpop.f32.mrb[0].mxu0
          %v1154 = vadd.f32 0.0, %v1153
          %v1155 = vpop.f32.mrb[0].mxu0
          %v1156 = vpop.f32.mrb[0].mxu0
          %v1157 = vadd.f32 0.0, %v1156
          %v1158 = vpop.f32.mrb[0].mxu0
          %1159 = vmatprep.mubr.bf16.mxu0 0
          %1160 = vmatmul.mubr.bf16.gmra.mrb[0].mxu0 %v942
          %v1161 = vpop.f32.mrb[0].mxu0
          %v1162 = vadd.f32 0.0, %v1161
          %v1163 = vpop.f32.mrb[0].mxu0
          %v1164 = vpop.f32.mrb[0].mxu0
          %v1165 = vadd.f32 0.0, %v1164
          %v1166 = vpop.f32.mrb[0].mxu0
          %1167 = vdwg.mxu0
          %v1200 = vunpack.c.l.b16 %v879
          %v1201 = vunpack.c.l.b16 %v880
          %v1202 = vunpack.c.l.b16 %v881
          %v1203 = vunpack.c.l.b16 %v882
          %v1204 = vunpack.c.l.b16 %v883
          %v1205 = vunpack.c.l.b16 %v884
          %v1206 = vunpack.c.l.b16 %v885
          %v1207 = vunpack.c.l.b16 %v886
          %v1208 = vunpack.c.l.b16 %v887
          %v1209 = vunpack.c.l.b16 %v888
          %v1210 = vunpack.c.l.b16 %v889
          %v1211 = vunpack.c.l.b16 %v890
          %v1212 = vunpack.c.l.b16 %v891
          %v1213 = vunpack.c.l.b16 %v892
          %v1214 = vunpack.c.l.b16 %v893
          %v1215 = vunpack.c.l.b16 %v894
          %v1216 = vunpack.c.l.b16 %v895
          %v1217 = vunpack.c.l.b16 %v896
          %v1218 = vunpack.c.l.b16 %v897
          %v1219 = vunpack.c.l.b16 %v898
          %v1220 = vunpack.c.l.b16 %v899
          %v1221 = vunpack.c.l.b16 %v900
          %v1222 = vunpack.c.l.b16 %v901
          %v1223 = vunpack.c.l.b16 %v902
          %v1224 = vunpack.c.l.b16 %v903
          %v1225 = vunpack.c.l.b16 %v904
          %v1226 = vunpack.c.l.b16 %v905
          %v1227 = vunpack.c.l.b16 %v906
          %v1228 = vunpack.c.l.b16 %v907
          %v1229 = vunpack.c.l.b16 %v908
          %v1230 = vunpack.c.l.b16 %v909
          %v1231 = vunpack.c.l.b16 %v910
          %v1232 = vpack.c.b16 %v1201, %v1200
          %v1233 = vpack.c.b16 %v1203, %v1202
          %v1234 = vpack.c.b16 %v1205, %v1204
          %v1235 = vpack.c.b16 %v1207, %v1206
          %v1236 = vpack.c.b16 %v1209, %v1208
          %v1237 = vpack.c.b16 %v1211, %v1210
          %v1238 = vpack.c.b16 %v1213, %v1212
          %v1239 = vpack.c.b16 %v1215, %v1214
          %v1240 = vpack.c.b16 %v1217, %v1216
          %v1241 = vpack.c.b16 %v1219, %v1218
          %v1242 = vpack.c.b16 %v1221, %v1220
          %v1243 = vpack.c.b16 %v1223, %v1222
          %v1244 = vpack.c.b16 %v1225, %v1224
          %v1245 = vpack.c.b16 %v1227, %v1226
          %v1246 = vpack.c.b16 %v1229, %v1228
          %v1247 = vpack.c.b16 %v1231, %v1230
          %v1280 = vunpack.c.l.b16 %v911
          %v1281 = vunpack.c.l.b16 %v912
          %v1282 = vunpack.c.l.b16 %v913
          %v1283 = vunpack.c.l.b16 %v914
          %v1284 = vunpack.c.l.b16 %v915
          %v1285 = vunpack.c.l.b16 %v916
          %v1286 = vunpack.c.l.b16 %v917
          %v1287 = vunpack.c.l.b16 %v918
          %v1288 = vunpack.c.l.b16 %v919
          %v1289 = vunpack.c.l.b16 %v920
          %v1290 = vunpack.c.l.b16 %v921
          %v1291 = vunpack.c.l.b16 %v922
          %v1292 = vunpack.c.l.b16 %v923
          %v1293 = vunpack.c.l.b16 %v924
          %v1294 = vunpack.c.l.b16 %v925
          %v1295 = vunpack.c.l.b16 %v926
          %v1296 = vpack.c.b16 %v1281, %v1280
          %v1297 = vpack.c.b16 %v1283, %v1282
          %v1298 = vpack.c.b16 %v1285, %v1284
          %v1299 = vpack.c.b16 %v1287, %v1286
          %v1300 = vpack.c.b16 %v1289, %v1288
          %v1301 = vpack.c.b16 %v1291, %v1290
          %v1302 = vpack.c.b16 %v1293, %v1292
          %v1303 = vpack.c.b16 %v1295, %v1294
          %1312 = vmatprep.subr.bf16.mxu0 0
          %1313 = vmatpush1.bf16.msra.mxu0 %v1296
          %1314 = vmatprep.subr.bf16.mxu0 0
          %1315 = vmatpush1.bf16.msra.mxu0 %v1297
          %1316 = vmatprep.subr.bf16.mxu0 0
          %1317 = vmatpush1.bf16.msra.mxu0 %v1298
          %1318 = vmatprep.subr.bf16.mxu0 0
          %1319 = vmatpush1.bf16.msra.mxu0 %v1299
          %1320 = vmatprep.subr.bf16.mxu0 0
          %1321 = vmatpush1.bf16.msra.mxu0 %v1300
          %1322 = vmatprep.subr.bf16.mxu0 0
          %1323 = vmatpush1.bf16.msra.mxu0 %v1301
          %1324 = vmatprep.subr.bf16.mxu0 0
          %1325 = vmatpush1.bf16.msra.mxu0 %v1302
          %1326 = vmatprep.subr.bf16.mxu0 0
          %1327 = vmatpush1.bf16.msra.mxu0 %v1303
          %1328 = vmatprep.subr.bf16.mxu0 0
          %1329 = vmatpush1.bf16.msra.mxu0 0
          %1330 = vmatprep.subr.bf16.mxu0 0
          %1331 = vmatpush1.bf16.msra.mxu0 0
          %1332 = vmatprep.subr.bf16.mxu0 0
          %1333 = vmatpush1.bf16.msra.mxu0 0
          %1334 = vmatprep.subr.bf16.mxu0 0
          %1335 = vmatpush1.bf16.msra.mxu0 0
          %1336 = vmatprep.subr.bf16.mxu0 0
          %1337 = vmatpush1.bf16.msra.mxu0 0
          %1338 = vmatprep.subr.bf16.mxu0 0
          %1339 = vmatpush1.bf16.msra.mxu0 0
          %1340 = vmatprep.subr.bf16.mxu0 0
          %1341 = vmatpush1.bf16.msra.mxu0 0
          %1342 = vmatprep.subr.bf16.mxu0 0
          %1343 = vmatpush1.bf16.msra.mxu0 0
          %1344 = vmatprep.mubr.bf16.mxu0 0
          %1345 = vmatmul.mubr.bf16.gmra.mrb[0].mxu0 %v1232
          %v1346 = vpop.f32.mrb[0].mxu0
          %v1347 = vadd.f32 %v1042, %v1346
          %v1348 = vpop.f32.mrb[0].mxu0
          %v1349 = vpop.f32.mrb[0].mxu0
          %v1350 = vadd.f32 %v1045, %v1349
          %v1351 = vpop.f32.mrb[0].mxu0
          %1352 = vmatprep.mubr.bf16.mxu0 0
          %1353 = vmatmul.mubr.bf16.gmra.mrb[0].mxu0 %v1233
          %v1354 = vpop.f32.mrb[0].mxu0
          %v1355 = vadd.f32 %v1050, %v1354
          %v1356 = vpop.f32.mrb[0].mxu0
          %v1357 = vpop.f32.mrb[0].mxu0
          %v1358 = vadd.f32 %v1053, %v1357
          %v1359 = vpop.f32.mrb[0].mxu0
          %1360 = vmatprep.mubr.bf16.mxu0 0
          %1361 = vmatmul.mubr.bf16.gmra.mrb[0].mxu0 %v1234
          %v1362 = vpop.f32.mrb[0].mxu0
          %v1363 = vadd.f32 %v1058, %v1362
          %v1364 = vpop.f32.mrb[0].mxu0
          %v1365 = vpop.f32.mrb[0].mxu0
          %v1366 = vadd.f32 %v1061, %v1365
          %v1367 = vpop.f32.mrb[0].mxu0
          %1368 = vmatprep.mubr.bf16.mxu0 0
          %1369 = vmatmul.mubr.bf16.gmra.mrb[0].mxu0 %v1235
          %v1370 = vpop.f32.mrb[0].mxu0
          %v1371 = vadd.f32 %v1066, %v1370
          %v1372 = vpop.f32.mrb[0].mxu0
          %v1373 = vpop.f32.mrb[0].mxu0
          %v1374 = vadd.f32 %v1069, %v1373
          %v1375 = vpop.f32.mrb[0].mxu0
          %1376 = vmatprep.mubr.bf16.mxu0 0
          %1377 = vmatmul.mubr.bf16.gmra.mrb[0].mxu0 %v1236
          %v1378 = vpop.f32.mrb[0].mxu0
          %v1379 = vadd.f32 %v1074, %v1378
          %v1380 = vpop.f32.mrb[0].mxu0
          %v1381 = vpop.f32.mrb[0].mxu0
          %v1382 = vadd.f32 %v1077, %v1381
          %v1383 = vpop.f32.mrb[0].mxu0
          %1384 = vmatprep.mubr.bf16.mxu0 0
          %1385 = vmatmul.mubr.bf16.gmra.mrb[0].mxu0 %v1237
          %v1386 = vpop.f32.mrb[0].mxu0
          %v1387 = vadd.f32 %v1082, %v1386
          %v1388 = vpop.f32.mrb[0].mxu0
          %v1389 = vpop.f32.mrb[0].mxu0
          %v1390 = vadd.f32 %v1085, %v1389
          %v1391 = vpop.f32.mrb[0].mxu0
          %1392 = vmatprep.mubr.bf16.mxu0 0
          %1393 = vmatmul.mubr.bf16.gmra.mrb[0].mxu0 %v1238
          %v1394 = vpop.f32.mrb[0].mxu0
          %v1395 = vadd.f32 %v1090, %v1394
          %v1396 = vpop.f32.mrb[0].mxu0
          %v1397 = vpop.f32.mrb[0].mxu0
          %v1398 = vadd.f32 %v1093, %v1397
          %v1399 = vpop.f32.mrb[0].mxu0
          %1400 = vmatprep.mubr.bf16.mxu0 0
          %1401 = vmatmul.mubr.bf16.gmra.mrb[0].mxu0 %v1239
          %v1402 = vpop.f32.mrb[0].mxu0
          %v1403 = vadd.f32 %v1098, %v1402
          %v1404 = vpop.f32.mrb[0].mxu0
          %v1405 = vpop.f32.mrb[0].mxu0
          %v1406 = vadd.f32 %v1101, %v1405
          %v1407 = vpop.f32.mrb[0].mxu0
          %1408 = vmatprep.mubr.bf16.mxu0 0
          %1409 = vmatmul.mubr.bf16.gmra.mrb[0].mxu0 %v1240
          %v1410 = vpop.f32.mrb[0].mxu0
          %v1411 = vadd.f32 %v1106, %v1410
          %v1412 = vpop.f32.mrb[0].mxu0
          %v1413 = vpop.f32.mrb[0].mxu0
          %v1414 = vadd.f32 %v1109, %v1413
          %v1415 = vpop.f32.mrb[0].mxu0
          %1416 = vmatprep.mubr.bf16.mxu0 0
          %1417 = vmatmul.mubr.bf16.gmra.mrb[0].mxu0 %v1241
          %v1418 = vpop.f32.mrb[0].mxu0
          %v1419 = vadd.f32 %v1114, %v1418
          %v1420 = vpop.f32.mrb[0].mxu0
          %v1421 = vpop.f32.mrb[0].mxu0
          %v1422 = vadd.f32 %v1117, %v1421
          %v1423 = vpop.f32.mrb[0].mxu0
          %1424 = vmatprep.mubr.bf16.mxu0 0
          %1425 = vmatmul.mubr.bf16.gmra.mrb[0].mxu0 %v1242
          %v1426 = vpop.f32.mrb[0].mxu0
          %v1427 = vadd.f32 %v1122, %v1426
          %v1428 = vpop.f32.mrb[0].mxu0
          %v1429 = vpop.f32.mrb[0].mxu0
          %v1430 = vadd.f32 %v1125, %v1429
          %v1431 = vpop.f32.mrb[0].mxu0
          %1432 = vmatprep.mubr.bf16.mxu0 0
          %1433 = vmatmul.mubr.bf16.gmra.mrb[0].mxu0 %v1243
          %v1434 = vpop.f32.mrb[0].mxu0
          %v1435 = vadd.f32 %v1130, %v1434
          %v1436 = vpop.f32.mrb[0].mxu0
          %v1437 = vpop.f32.mrb[0].mxu0
          %v1438 = vadd.f32 %v1133, %v1437
          %v1439 = vpop.f32.mrb[0].mxu0
          %1440 = vmatprep.mubr.bf16.mxu0 0
          %1441 = vmatmul.mubr.bf16.gmra.mrb[0].mxu0 %v1244
          %v1442 = vpop.f32.mrb[0].mxu0
          %v1443 = vadd.f32 %v1138, %v1442
          %v1444 = vpop.f32.mrb[0].mxu0
          %v1445 = vpop.f32.mrb[0].mxu0
          %v1446 = vadd.f32 %v1141, %v1445
          %v1447 = vpop.f32.mrb[0].mxu0
          %1448 = vmatprep.mubr.bf16.mxu0 0
          %1449 = vmatmul.mubr.bf16.gmra.mrb[0].mxu0 %v1245
          %v1450 = vpop.f32.mrb[0].mxu0
          %v1451 = vadd.f32 %v1146, %v1450
          %v1452 = vpop.f32.mrb[0].mxu0
          %v1453 = vpop.f32.mrb[0].mxu0
          %v1454 = vadd.f32 %v1149, %v1453
          %v1455 = vpop.f32.mrb[0].mxu0
          %1456 = vmatprep.mubr.bf16.mxu0 0
          %1457 = vmatmul.mubr.bf16.gmra.mrb[0].mxu0 %v1246
          %v1458 = vpop.f32.mrb[0].mxu0
          %v1459 = vadd.f32 %v1154, %v1458
          %v1460 = vpop.f32.mrb[0].mxu0
          %v1461 = vpop.f32.mrb[0].mxu0
          %v1462 = vadd.f32 %v1157, %v1461
          %v1463 = vpop.f32.mrb[0].mxu0
          %1464 = vmatprep.mubr.bf16.mxu0 0
          %1465 = vmatmul.mubr.bf16.gmra.mrb[0].mxu0 %v1247
          %v1466 = vpop.f32.mrb[0].mxu0
          %v1467 = vadd.f32 %v1162, %v1466
          %v1468 = vpop.f32.mrb[0].mxu0
          %v1469 = vpop.f32.mrb[0].mxu0
          %v1470 = vadd.f32 %v1165, %v1469
          %v1471 = vpop.f32.mrb[0].mxu0
          %1472 = vdwg.mxu0
          %v1473 = vld [vmem:[%s4] sm:$0x1]
          %v1475 = vlaneseq
          %v1476 = vshrl.u32 %v1475, 7
          %v1477 = vsub.s32 0, %v1476
          %v1478 = vrot.slane %v1473, %v1477
          %v1480 = vadd.f32 %v1347, %v1478
          %v1481 = vadd.f32 %v1350, %v1478
          %v1482 = vadd.f32 %v1355, %v1478
          %v1483 = vadd.f32 %v1358, %v1478
          %v1484 = vadd.f32 %v1363, %v1478
          %v1485 = vadd.f32 %v1366, %v1478
          %v1486 = vadd.f32 %v1371, %v1478
          %v1487 = vadd.f32 %v1374, %v1478
          %v1488 = vadd.f32 %v1379, %v1478
          %v1489 = vadd.f32 %v1382, %v1478
          %v1490 = vadd.f32 %v1387, %v1478
          %v1491 = vadd.f32 %v1390, %v1478
          %v1492 = vadd.f32 %v1395, %v1478
          %v1493 = vadd.f32 %v1398, %v1478
          %v1494 = vadd.f32 %v1403, %v1478
          %v1495 = vadd.f32 %v1406, %v1478
          %v1496 = vadd.f32 %v1411, %v1478
          %v1497 = vadd.f32 %v1414, %v1478
          %v1498 = vadd.f32 %v1419, %v1478
          %v1499 = vadd.f32 %v1422, %v1478
          %v1500 = vadd.f32 %v1427, %v1478
          %v1501 = vadd.f32 %v1430, %v1478
          %v1502 = vadd.f32 %v1435, %v1478
          %v1503 = vadd.f32 %v1438, %v1478
          %v1504 = vadd.f32 %v1443, %v1478
          %v1505 = vadd.f32 %v1446, %v1478
          %v1506 = vadd.f32 %v1451, %v1478
          %v1507 = vadd.f32 %v1454, %v1478
          %v1508 = vadd.f32 %v1459, %v1478
          %v1509 = vadd.f32 %v1462, %v1478
          %v1510 = vadd.f32 %v1467, %v1478
          %v1511 = vadd.f32 %v1470, %v1478
          %v1512 = vmax.f32 %v1480, 0.0
          %v1513 = vmax.f32 %v1481, 0.0
          %v1514 = vmax.f32 %v1482, 0.0
          %v1515 = vmax.f32 %v1483, 0.0
          %v1516 = vmax.f32 %v1484, 0.0
          %v1517 = vmax.f32 %v1485, 0.0
          %v1518 = vmax.f32 %v1486, 0.0
          %v1519 = vmax.f32 %v1487, 0.0
          %v1520 = vmax.f32 %v1488, 0.0
          %v1521 = vmax.f32 %v1489, 0.0
          %v1522 = vmax.f32 %v1490, 0.0
          %v1523 = vmax.f32 %v1491, 0.0
          %v1524 = vmax.f32 %v1492, 0.0
          %v1525 = vmax.f32 %v1493, 0.0
          %v1526 = vmax.f32 %v1494, 0.0
          %v1527 = vmax.f32 %v1495, 0.0
          %v1528 = vmax.f32 %v1496, 0.0
          %v1529 = vmax.f32 %v1497, 0.0
          %v1530 = vmax.f32 %v1498, 0.0
          %v1531 = vmax.f32 %v1499, 0.0
          %v1532 = vmax.f32 %v1500, 0.0
          %v1533 = vmax.f32 %v1501, 0.0
          %v1534 = vmax.f32 %v1502, 0.0
          %v1535 = vmax.f32 %v1503, 0.0
          %v1536 = vmax.f32 %v1504, 0.0
          %v1537 = vmax.f32 %v1505, 0.0
          %v1538 = vmax.f32 %v1506, 0.0
          %v1539 = vmax.f32 %v1507, 0.0
          %v1540 = vmax.f32 %v1508, 0.0
          %v1541 = vmax.f32 %v1509, 0.0
          %v1542 = vmax.f32 %v1510, 0.0
          %v1543 = vmax.f32 %v1511, 0.0
          %v1544 = vpack.c.bf16 %v1513, %v1512
          %v1545 = vpack.c.bf16 %v1515, %v1514
          %v1546 = vpack.c.bf16 %v1517, %v1516
          %v1547 = vpack.c.bf16 %v1519, %v1518
          %v1548 = vpack.c.bf16 %v1521, %v1520
          %v1549 = vpack.c.bf16 %v1523, %v1522
          %v1550 = vpack.c.bf16 %v1525, %v1524
          %v1551 = vpack.c.bf16 %v1527, %v1526
          %v1552 = vpack.c.bf16 %v1529, %v1528
          %v1553 = vpack.c.bf16 %v1531, %v1530
          %v1554 = vpack.c.bf16 %v1533, %v1532
          %v1555 = vpack.c.bf16 %v1535, %v1534
          %v1556 = vpack.c.bf16 %v1537, %v1536
          %v1557 = vpack.c.bf16 %v1539, %v1538
          %v1558 = vpack.c.bf16 %v1541, %v1540
          %v1559 = vpack.c.bf16 %v1543, %v1542
          %s1560 = sshra.s32 %s389, 4
          %s1561 = sand.u32 %s389, 15
          %s1562 = smul.addr %s1560, 8
          %s1563 = scalar_lea.vmem [#allocation2], %s1562
          %1564 = vst [vmem:[%s1563] sm:$0xff] %v1544
          %1565 = vst [vmem:[%s1563 + $0x8] sm:$0xff] %v1545
          %1566 = vst [vmem:[%s1563 + $0x10] sm:$0xff] %v1546
          %1567 = vst [vmem:[%s1563 + $0x18] sm:$0xff] %v1547
          %1568 = vst [vmem:[%s1563 + $0x20] sm:$0xff] %v1548
          %1569 = vst [vmem:[%s1563 + $0x28] sm:$0xff] %v1549
          %1570 = vst [vmem:[%s1563 + $0x30] sm:$0xff] %v1550
          %1571 = vst [vmem:[%s1563 + $0x38] sm:$0xff] %v1551
          %1572 = vst [vmem:[%s1563 + $0x40] sm:$0xff] %v1552
          %1573 = vst [vmem:[%s1563 + $0x48] sm:$0xff] %v1553
          %1574 = vst [vmem:[%s1563 + $0x50] sm:$0xff] %v1554
          %1575 = vst [vmem:[%s1563 + $0x58] sm:$0xff] %v1555
          %1576 = vst [vmem:[%s1563 + $0x60] sm:$0xff] %v1556
          %1577 = vst [vmem:[%s1563 + $0x68] sm:$0xff] %v1557
          %1578 = vst [vmem:[%s1563 + $0x70] sm:$0xff] %v1558
          %1579 = vst [vmem:[%s1563 + $0x78] sm:$0xff] %v1559
        $region80: #{tpu_custom_call.1} parent=51 // pred_fallthru
          _
        %p1580 = scmp.eq.s32.totalorder %s28, 1
        // Predicated region
        $region81: #{tpu_custom_call.1} parent=51 // pred_check
          %p1581 = pneg %p1580
        $region82: #{tpu_custom_call.1} parent=51 // pred_check_branch
          %1583 = sbr.rel (%p1581) target = $region84
        $region83: #{tpu_custom_call.1} parent=51 // pred_region
          %v1584 = vld [vmem:[#allocation3] sm:$0xff]
          %v1585 = vld [vmem:[#allocation3 + $0x8] sm:$0xff]
          %v1586 = vld [vmem:[#allocation3 + $0x10] sm:$0xff]
          %v1587 = vld [vmem:[#allocation3 + $0x18] sm:$0xff]
          %v1588 = vld [vmem:[#allocation3 + $0x20] sm:$0xff]
          %v1589 = vld [vmem:[#allocation3 + $0x28] sm:$0xff]
          %v1590 = vld [vmem:[#allocation3 + $0x30] sm:$0xff]
          %v1591 = vld [vmem:[#allocation3 + $0x38] sm:$0xff]
          %v1592 = vld [vmem:[#allocation3 + $0x40] sm:$0xff]
          %v1593 = vld [vmem:[#allocation3 + $0x48] sm:$0xff]
          %v1594 = vld [vmem:[#allocation3 + $0x50] sm:$0xff]
          %v1595 = vld [vmem:[#allocation3 + $0x58] sm:$0xff]
          %v1596 = vld [vmem:[#allocation3 + $0x60] sm:$0xff]
          %v1597 = vld [vmem:[#allocation3 + $0x68] sm:$0xff]
          %v1598 = vld [vmem:[#allocation3 + $0x70] sm:$0xff]
          %v1599 = vld [vmem:[#allocation3 + $0x78] sm:$0xff]
          %v1600 = vld [vmem:[#allocation3 + $0x80] sm:$0xff]
          %v1601 = vld [vmem:[#allocation3 + $0x88] sm:$0xff]
          %v1602 = vld [vmem:[#allocation3 + $0x90] sm:$0xff]
          %v1603 = vld [vmem:[#allocation3 + $0x98] sm:$0xff]
          %v1604 = vld [vmem:[#allocation3 + $0xa0] sm:$0xff]
          %v1605 = vld [vmem:[#allocation3 + $0xa8] sm:$0xff]
          %v1606 = vld [vmem:[#allocation3 + $0xb0] sm:$0xff]
          %v1607 = vld [vmem:[#allocation3 + $0xb8] sm:$0xff]
          %v1608 = vld [vmem:[#allocation3 + $0xc0] sm:$0xff]
          %v1609 = vld [vmem:[#allocation3 + $0xc8] sm:$0xff]
          %v1610 = vld [vmem:[#allocation3 + $0xd0] sm:$0xff]
          %v1611 = vld [vmem:[#allocation3 + $0xd8] sm:$0xff]
          %v1612 = vld [vmem:[#allocation3 + $0xe0] sm:$0xff]
          %v1613 = vld [vmem:[#allocation3 + $0xe8] sm:$0xff]
          %v1614 = vld [vmem:[#allocation3 + $0xf0] sm:$0xff]
          %v1615 = vld [vmem:[#allocation3 + $0xf8] sm:$0xff]
          %v1616 = vld [vmem:[#allocation2] sm:$0xff]
          %v1617 = vld [vmem:[#allocation2 + $0x8] sm:$0xff]
          %v1618 = vld [vmem:[#allocation2 + $0x10] sm:$0xff]
          %v1619 = vld [vmem:[#allocation2 + $0x18] sm:$0xff]
          %v1620 = vld [vmem:[#allocation2 + $0x20] sm:$0xff]
          %v1621 = vld [vmem:[#allocation2 + $0x28] sm:$0xff]
          %v1622 = vld [vmem:[#allocation2 + $0x30] sm:$0xff]
          %v1623 = vld [vmem:[#allocation2 + $0x38] sm:$0xff]
          %v1624 = vld [vmem:[#allocation2 + $0x40] sm:$0xff]
          %v1625 = vld [vmem:[#allocation2 + $0x48] sm:$0xff]
          %v1626 = vld [vmem:[#allocation2 + $0x50] sm:$0xff]
          %v1627 = vld [vmem:[#allocation2 + $0x58] sm:$0xff]
          %v1628 = vld [vmem:[#allocation2 + $0x60] sm:$0xff]
          %v1629 = vld [vmem:[#allocation2 + $0x68] sm:$0xff]
          %v1630 = vld [vmem:[#allocation2 + $0x70] sm:$0xff]
          %v1631 = vld [vmem:[#allocation2 + $0x78] sm:$0xff]
          %v1664 = vunpack.c.l.b16 %v1584
          %v1665 = vunpack.c.h.b16 %v1584
          %v1666 = vunpack.c.l.b16 %v1585
          %v1667 = vunpack.c.h.b16 %v1585
          %v1668 = vunpack.c.l.b16 %v1586
          %v1669 = vunpack.c.h.b16 %v1586
          %v1670 = vunpack.c.l.b16 %v1587
          %v1671 = vunpack.c.h.b16 %v1587
          %v1672 = vunpack.c.l.b16 %v1588
          %v1673 = vunpack.c.h.b16 %v1588
          %v1674 = vunpack.c.l.b16 %v1589
          %v1675 = vunpack.c.h.b16 %v1589
          %v1676 = vunpack.c.l.b16 %v1590
          %v1677 = vunpack.c.h.b16 %v1590
          %v1678 = vunpack.c.l.b16 %v1591
          %v1679 = vunpack.c.h.b16 %v1591
          %v1680 = vunpack.c.l.b16 %v1592
          %v1681 = vunpack.c.h.b16 %v1592
          %v1682 = vunpack.c.l.b16 %v1593
          %v1683 = vunpack.c.h.b16 %v1593
          %v1684 = vunpack.c.l.b16 %v1594
          %v1685 = vunpack.c.h.b16 %v1594
          %v1686 = vunpack.c.l.b16 %v1595
          %v1687 = vunpack.c.h.b16 %v1595
          %v1688 = vunpack.c.l.b16 %v1596
          %v1689 = vunpack.c.h.b16 %v1596
          %v1690 = vunpack.c.l.b16 %v1597
          %v1691 = vunpack.c.h.b16 %v1597
          %v1692 = vunpack.c.l.b16 %v1598
          %v1693 = vunpack.c.h.b16 %v1598
          %v1694 = vunpack.c.l.b16 %v1599
          %v1695 = vunpack.c.h.b16 %v1599
          %v1696 = vunpack.c.l.b16 %v1600
          %v1697 = vunpack.c.h.b16 %v1600
          %v1698 = vunpack.c.l.b16 %v1601
          %v1699 = vunpack.c.h.b16 %v1601
          %v1700 = vunpack.c.l.b16 %v1602
          %v1701 = vunpack.c.h.b16 %v1602
          %v1702 = vunpack.c.l.b16 %v1603
          %v1703 = vunpack.c.h.b16 %v1603
          %v1704 = vunpack.c.l.b16 %v1604
          %v1705 = vunpack.c.h.b16 %v1604
          %v1706 = vunpack.c.l.b16 %v1605
          %v1707 = vunpack.c.h.b16 %v1605
          %v1708 = vunpack.c.l.b16 %v1606
          %v1709 = vunpack.c.h.b16 %v1606
          %v1710 = vunpack.c.l.b16 %v1607
          %v1711 = vunpack.c.h.b16 %v1607
          %v1712 = vunpack.c.l.b16 %v1608
          %v1713 = vunpack.c.h.b16 %v1608
          %v1714 = vunpack.c.l.b16 %v1609
          %v1715 = vunpack.c.h.b16 %v1609
          %v1716 = vunpack.c.l.b16 %v1610
          %v1717 = vunpack.c.h.b16 %v1610
          %v1718 = vunpack.c.l.b16 %v1611
          %v1719 = vunpack.c.h.b16 %v1611
          %v1720 = vunpack.c.l.b16 %v1612
          %v1721 = vunpack.c.h.b16 %v1612
          %v1722 = vunpack.c.l.b16 %v1613
          %v1723 = vunpack.c.h.b16 %v1613
          %v1724 = vunpack.c.l.b16 %v1614
          %v1725 = vunpack.c.h.b16 %v1614
          %v1726 = vunpack.c.l.b16 %v1615
          %v1727 = vunpack.c.h.b16 %v1615
          %v1728 = vpack.c.b16 %v1666, %v1664
          %v1729 = vpack.c.b16 %v1667, %v1665
          %v1730 = vpack.c.b16 %v1670, %v1668
          %v1731 = vpack.c.b16 %v1671, %v1669
          %v1732 = vpack.c.b16 %v1674, %v1672
          %v1733 = vpack.c.b16 %v1675, %v1673
          %v1734 = vpack.c.b16 %v1678, %v1676
          %v1735 = vpack.c.b16 %v1679, %v1677
          %v1736 = vpack.c.b16 %v1682, %v1680
          %v1737 = vpack.c.b16 %v1683, %v1681
          %v1738 = vpack.c.b16 %v1686, %v1684
          %v1739 = vpack.c.b16 %v1687, %v1685
          %v1740 = vpack.c.b16 %v1690, %v1688
          %v1741 = vpack.c.b16 %v1691, %v1689
          %v1742 = vpack.c.b16 %v1694, %v1692
          %v1743 = vpack.c.b16 %v1695, %v1693
          %v1744 = vpack.c.b16 %v1698, %v1696
          %v1745 = vpack.c.b16 %v1699, %v1697
          %v1746 = vpack.c.b16 %v1702, %v1700
          %v1747 = vpack.c.b16 %v1703, %v1701
          %v1748 = vpack.c.b16 %v1706, %v1704
          %v1749 = vpack.c.b16 %v1707, %v1705
          %v1750 = vpack.c.b16 %v1710, %v1708
          %v1751 = vpack.c.b16 %v1711, %v1709
          %v1752 = vpack.c.b16 %v1714, %v1712
          %v1753 = vpack.c.b16 %v1715, %v1713
          %v1754 = vpack.c.b16 %v1718, %v1716
          %v1755 = vpack.c.b16 %v1719, %v1717
          %v1756 = vpack.c.b16 %v1722, %v1720
          %v1757 = vpack.c.b16 %v1723, %v1721
          %v1758 = vpack.c.b16 %v1726, %v1724
          %v1759 = vpack.c.b16 %v1727, %v1725
          %1792 = vmatprep.subr.bf16.mxu0 0
          %1793 = vmatpush1.bf16.msra.mxu0 %v1616
          %1794 = vmatprep.subr.bf16.mxu0 0
          %1795 = vmatpush1.bf16.msra.mxu0 %v1617
          %1796 = vmatprep.subr.bf16.mxu0 0
          %1797 = vmatpush1.bf16.msra.mxu0 %v1618
          %1798 = vmatprep.subr.bf16.mxu0 0
          %1799 = vmatpush1.bf16.msra.mxu0 %v1619
          %1800 = vmatprep.subr.bf16.mxu0 0
          %1801 = vmatpush1.bf16.msra.mxu0 %v1620
          %1802 = vmatprep.subr.bf16.mxu0 0
          %1803 = vmatpush1.bf16.msra.mxu0 %v1621
          %1804 = vmatprep.subr.bf16.mxu0 0
          %1805 = vmatpush1.bf16.msra.mxu0 %v1622
          %1806 = vmatprep.subr.bf16.mxu0 0
          %1807 = vmatpush1.bf16.msra.mxu0 %v1623
          %1808 = vmatprep.subr.bf16.mxu0 0
          %1809 = vmatpush1.bf16.msra.mxu0 %v1624
          %1810 = vmatprep.subr.bf16.mxu0 0
          %1811 = vmatpush1.bf16.msra.mxu0 %v1625
          %1812 = vmatprep.subr.bf16.mxu0 0
          %1813 = vmatpush1.bf16.msra.mxu0 %v1626
          %1814 = vmatprep.subr.bf16.mxu0 0
          %1815 = vmatpush1.bf16.msra.mxu0 %v1627
          %1816 = vmatprep.subr.bf16.mxu0 0
          %1817 = vmatpush1.bf16.msra.mxu0 %v1628
          %1818 = vmatprep.subr.bf16.mxu0 0
          %1819 = vmatpush1.bf16.msra.mxu0 %v1629
          %1820 = vmatprep.subr.bf16.mxu0 0
          %1821 = vmatpush1.bf16.msra.mxu0 %v1630
          %1822 = vmatprep.subr.bf16.mxu0 0
          %1823 = vmatpush1.bf16.msra.mxu0 %v1631
          %1824 = vmatprep.mubr.bf16.mxu0 %v1729
          %1825 = vmatmul.mubr.bf16.gmra.mrb[0].mxu0 %v1728
          %v1826 = vpop.f32.mrb[0].mxu0
          %v1827 = vadd.f32 0.0, %v1826
          %v1828 = vpop.f32.mrb[0].mxu0
          %v1829 = vpop.f32.mrb[0].mxu0
          %v1830 = vadd.f32 0.0, %v1829
          %v1831 = vpop.f32.mrb[0].mxu0
          %1832 = vmatprep.mubr.bf16.mxu0 %v1731
          %1833 = vmatmul.mubr.bf16.gmra.mrb[0].mxu0 %v1730
          %v1834 = vpop.f32.mrb[0].mxu0
          %v1835 = vadd.f32 0.0, %v1834
          %v1836 = vpop.f32.mrb[0].mxu0
          %v1837 = vpop.f32.mrb[0].mxu0
          %v1838 = vadd.f32 0.0, %v1837
          %v1839 = vpop.f32.mrb[0].mxu0
          %1840 = vmatprep.mubr.bf16.mxu0 %v1733
          %1841 = vmatmul.mubr.bf16.gmra.mrb[0].mxu0 %v1732
          %v1842 = vpop.f32.mrb[0].mxu0
          %v1843 = vadd.f32 0.0, %v1842
          %v1844 = vpop.f32.mrb[0].mxu0
          %v1845 = vpop.f32.mrb[0].mxu0
          %v1846 = vadd.f32 0.0, %v1845
          %v1847 = vpop.f32.mrb[0].mxu0
          %1848 = vmatprep.mubr.bf16.mxu0 %v1735
          %1849 = vmatmul.mubr.bf16.gmra.mrb[0].mxu0 %v1734
          %v1850 = vpop.f32.mrb[0].mxu0
          %v1851 = vadd.f32 0.0, %v1850
          %v1852 = vpop.f32.mrb[0].mxu0
          %v1853 = vpop.f32.mrb[0].mxu0
          %v1854 = vadd.f32 0.0, %v1853
          %v1855 = vpop.f32.mrb[0].mxu0
          %1856 = vmatprep.mubr.bf16.mxu0 %v1737
          %1857 = vmatmul.mubr.bf16.gmra.mrb[0].mxu0 %v1736
          %v1858 = vpop.f32.mrb[0].mxu0
          %v1859 = vadd.f32 0.0, %v1858
          %v1860 = vpop.f32.mrb[0].mxu0
          %v1861 = vpop.f32.mrb[0].mxu0
          %v1862 = vadd.f32 0.0, %v1861
          %v1863 = vpop.f32.mrb[0].mxu0
          %1864 = vmatprep.mubr.bf16.mxu0 %v1739
          %1865 = vmatmul.mubr.bf16.gmra.mrb[0].mxu0 %v1738
          %v1866 = vpop.f32.mrb[0].mxu0
          %v1867 = vadd.f32 0.0, %v1866
          %v1868 = vpop.f32.mrb[0].mxu0
          %v1869 = vpop.f32.mrb[0].mxu0
          %v1870 = vadd.f32 0.0, %v1869
          %v1871 = vpop.f32.mrb[0].mxu0
          %1872 = vmatprep.mubr.bf16.mxu0 %v1741
          %1873 = vmatmul.mubr.bf16.gmra.mrb[0].mxu0 %v1740
          %v1874 = vpop.f32.mrb[0].mxu0
          %v1875 = vadd.f32 0.0, %v1874
          %v1876 = vpop.f32.mrb[0].mxu0
          %v1877 = vpop.f32.mrb[0].mxu0
          %v1878 = vadd.f32 0.0, %v1877
          %v1879 = vpop.f32.mrb[0].mxu0
          %1880 = vmatprep.mubr.bf16.mxu0 %v1743
          %1881 = vmatmul.mubr.bf16.gmra.mrb[0].mxu0 %v1742
          %v1882 = vpop.f32.mrb[0].mxu0
          %v1883 = vadd.f32 0.0, %v1882
          %v1884 = vpop.f32.mrb[0].mxu0
          %v1885 = vpop.f32.mrb[0].mxu0
          %v1886 = vadd.f32 0.0, %v1885
          %v1887 = vpop.f32.mrb[0].mxu0
          %1888 = vmatprep.mubr.bf16.mxu0 %v1745
          %1889 = vmatmul.mubr.bf16.gmra.mrb[0].mxu0 %v1744
          %v1890 = vpop.f32.mrb[0].mxu0
          %v1891 = vadd.f32 0.0, %v1890
          %v1892 = vpop.f32.mrb[0].mxu0
          %v1893 = vpop.f32.mrb[0].mxu0
          %v1894 = vadd.f32 0.0, %v1893
          %v1895 = vpop.f32.mrb[0].mxu0
          %1896 = vmatprep.mubr.bf16.mxu0 %v1747
          %1897 = vmatmul.mubr.bf16.gmra.mrb[0].mxu0 %v1746
          %v1898 = vpop.f32.mrb[0].mxu0
          %v1899 = vadd.f32 0.0, %v1898
          %v1900 = vpop.f32.mrb[0].mxu0
          %v1901 = vpop.f32.mrb[0].mxu0
          %v1902 = vadd.f32 0.0, %v1901
          %v1903 = vpop.f32.mrb[0].mxu0
          %1904 = vmatprep.mubr.bf16.mxu0 %v1749
          %1905 = vmatmul.mubr.bf16.gmra.mrb[0].mxu0 %v1748
          %v1906 = vpop.f32.mrb[0].mxu0
          %v1907 = vadd.f32 0.0, %v1906
          %v1908 = vpop.f32.mrb[0].mxu0
          %v1909 = vpop.f32.mrb[0].mxu0
          %v1910 = vadd.f32 0.0, %v1909
          %v1911 = vpop.f32.mrb[0].mxu0
          %1912 = vmatprep.mubr.bf16.mxu0 %v1751
          %1913 = vmatmul.mubr.bf16.gmra.mrb[0].mxu0 %v1750
          %v1914 = vpop.f32.mrb[0].mxu0
          %v1915 = vadd.f32 0.0, %v1914
          %v1916 = vpop.f32.mrb[0].mxu0
          %v1917 = vpop.f32.mrb[0].mxu0
          %v1918 = vadd.f32 0.0, %v1917
          %v1919 = vpop.f32.mrb[0].mxu0
          %1920 = vmatprep.mubr.bf16.mxu0 %v1753
          %1921 = vmatmul.mubr.bf16.gmra.mrb[0].mxu0 %v1752
          %v1922 = vpop.f32.mrb[0].mxu0
          %v1923 = vadd.f32 0.0, %v1922
          %v1924 = vpop.f32.mrb[0].mxu0
          %v1925 = vpop.f32.mrb[0].mxu0
          %v1926 = vadd.f32 0.0, %v1925
          %v1927 = vpop.f32.mrb[0].mxu0
          %1928 = vmatprep.mubr.bf16.mxu0 %v1755
          %1929 = vmatmul.mubr.bf16.gmra.mrb[0].mxu0 %v1754
          %v1930 = vpop.f32.mrb[0].mxu0
          %v1931 = vadd.f32 0.0, %v1930
          %v1932 = vpop.f32.mrb[0].mxu0
          %v1933 = vpop.f32.mrb[0].mxu0
          %v1934 = vadd.f32 0.0, %v1933
          %v1935 = vpop.f32.mrb[0].mxu0
          %1936 = vmatprep.mubr.bf16.mxu0 %v1757
          %1937 = vmatmul.mubr.bf16.gmra.mrb[0].mxu0 %v1756
          %v1938 = vpop.f32.mrb[0].mxu0
          %v1939 = vadd.f32 0.0, %v1938
          %v1940 = vpop.f32.mrb[0].mxu0
          %v1941 = vpop.f32.mrb[0].mxu0
          %v1942 = vadd.f32 0.0, %v1941
          %v1943 = vpop.f32.mrb[0].mxu0
          %1944 = vmatprep.mubr.bf16.mxu0 %v1759
          %1945 = vmatmul.mubr.bf16.gmra.mrb[0].mxu0 %v1758
          %v1946 = vpop.f32.mrb[0].mxu0
          %v1947 = vadd.f32 0.0, %v1946
          %v1948 = vpop.f32.mrb[0].mxu0
          %v1949 = vpop.f32.mrb[0].mxu0
          %v1950 = vadd.f32 0.0, %v1949
          %v1951 = vpop.f32.mrb[0].mxu0
          %1952 = vdwg.mxu0
          %s1953 = sshra.s32 %s389, 4
          %s1954 = sand.u32 %s389, 15
          %s1955 = smul.addr %s1953, 8
          %s1956 = scalar_lea.vmem [#allocation2], %s1955
          %v1957 = vld [vmem:[%s1956] sm:$0xff]
          %v1958 = vld [vmem:[%s1956 + $0x8] sm:$0xff]
          %v1959 = vld [vmem:[%s1956 + $0x10] sm:$0xff]
          %v1960 = vld [vmem:[%s1956 + $0x18] sm:$0xff]
          %v1961 = vld [vmem:[%s1956 + $0x20] sm:$0xff]
          %v1962 = vld [vmem:[%s1956 + $0x28] sm:$0xff]
          %v1963 = vld [vmem:[%s1956 + $0x30] sm:$0xff]
          %v1964 = vld [vmem:[%s1956 + $0x38] sm:$0xff]
          %v1965 = vld [vmem:[%s1956 + $0x40] sm:$0xff]
          %v1966 = vld [vmem:[%s1956 + $0x48] sm:$0xff]
          %v1967 = vld [vmem:[%s1956 + $0x50] sm:$0xff]
          %v1968 = vld [vmem:[%s1956 + $0x58] sm:$0xff]
          %v1969 = vld [vmem:[%s1956 + $0x60] sm:$0xff]
          %v1970 = vld [vmem:[%s1956 + $0x68] sm:$0xff]
          %v1971 = vld [vmem:[%s1956 + $0x70] sm:$0xff]
          %v1972 = vld [vmem:[%s1956 + $0x78] sm:$0xff]
          %v1973 = vld [vmem:[#allocation11] sm:$0xf]
          %v1974 = vld [vmem:[#allocation11 + $0x4] sm:$0xf]
          %v1975 = vld [vmem:[#allocation11 + $0x8] sm:$0xf]
          %v1976 = vld [vmem:[#allocation11 + $0xc] sm:$0xf]
          %v1977 = vld [vmem:[#allocation11 + $0x10] sm:$0xf]
          %v1978 = vld [vmem:[#allocation11 + $0x14] sm:$0xf]
          %v1979 = vld [vmem:[#allocation11 + $0x18] sm:$0xf]
          %v1980 = vld [vmem:[#allocation11 + $0x1c] sm:$0xf]
          %v1981 = vld [vmem:[#allocation11 + $0x20] sm:$0xf]
          %v1982 = vld [vmem:[#allocation11 + $0x24] sm:$0xf]
          %v1983 = vld [vmem:[#allocation11 + $0x28] sm:$0xf]
          %v1984 = vld [vmem:[#allocation11 + $0x2c] sm:$0xf]
          %v1985 = vld [vmem:[#allocation11 + $0x30] sm:$0xf]
          %v1986 = vld [vmem:[#allocation11 + $0x34] sm:$0xf]
          %v1987 = vld [vmem:[#allocation11 + $0x38] sm:$0xf]
          %v1988 = vld [vmem:[#allocation11 + $0x3c] sm:$0xf]
          %v1989 = vpack.c.bf16 %v1830, %v1827
          %v1990 = vpack.c.bf16 %v1838, %v1835
          %v1991 = vpack.c.bf16 %v1846, %v1843
          %v1992 = vpack.c.bf16 %v1854, %v1851
          %v1993 = vpack.c.bf16 %v1862, %v1859
          %v1994 = vpack.c.bf16 %v1870, %v1867
          %v1995 = vpack.c.bf16 %v1878, %v1875
          %v1996 = vpack.c.bf16 %v1886, %v1883
          %v1997 = vpack.c.bf16 %v1894, %v1891
          %v1998 = vpack.c.bf16 %v1902, %v1899
          %v1999 = vpack.c.bf16 %v1910, %v1907
          %v2000 = vpack.c.bf16 %v1918, %v1915
          %v2001 = vpack.c.bf16 %v1926, %v1923
          %v2002 = vpack.c.bf16 %v1934, %v1931
          %v2003 = vpack.c.bf16 %v1942, %v1939
          %v2004 = vpack.c.bf16 %v1950, %v1947
          %v2005 = vld [vmem:[#allocation12] sm:$0xf]
          %v2006 = vld [vmem:[#allocation12 + $0x4] sm:$0xf]
          %v2007 = vld [vmem:[#allocation12 + $0x8] sm:$0xf]
          %v2008 = vld [vmem:[#allocation12 + $0xc] sm:$0xf]
          %v2009 = vld [vmem:[#allocation12 + $0x10] sm:$0xf]
          %v2010 = vld [vmem:[#allocation12 + $0x14] sm:$0xf]
          %v2011 = vld [vmem:[#allocation12 + $0x18] sm:$0xf]
          %v2012 = vld [vmem:[#allocation12 + $0x1c] sm:$0xf]
          %v2013 = vld [vmem:[#allocation12 + $0x20] sm:$0xf]
          %v2014 = vld [vmem:[#allocation12 + $0x24] sm:$0xf]
          %v2015 = vld [vmem:[#allocation12 + $0x28] sm:$0xf]
          %v2016 = vld [vmem:[#allocation12 + $0x2c] sm:$0xf]
          %v2017 = vld [vmem:[#allocation12 + $0x30] sm:$0xf]
          %v2018 = vld [vmem:[#allocation12 + $0x34] sm:$0xf]
          %v2019 = vld [vmem:[#allocation12 + $0x38] sm:$0xf]
          %v2020 = vld [vmem:[#allocation12 + $0x3c] sm:$0xf]
          %v2037 = vunpack.c.l.b16 %v2005
          %v2038 = vunpack.c.l.b16 %v2006
          %v2039 = vunpack.c.l.b16 %v2007
          %v2040 = vunpack.c.l.b16 %v2008
          %v2041 = vunpack.c.l.b16 %v2009
          %v2042 = vunpack.c.l.b16 %v2010
          %v2043 = vunpack.c.l.b16 %v2011
          %v2044 = vunpack.c.l.b16 %v2012
          %v2045 = vunpack.c.l.b16 %v2013
          %v2046 = vunpack.c.l.b16 %v2014
          %v2047 = vunpack.c.l.b16 %v2015
          %v2048 = vunpack.c.l.b16 %v2016
          %v2049 = vunpack.c.l.b16 %v2017
          %v2050 = vunpack.c.l.b16 %v2018
          %v2051 = vunpack.c.l.b16 %v2019
          %v2052 = vunpack.c.l.b16 %v2020
          %v2053 = vpack.c.b16 %v2038, %v2037
          %v2054 = vpack.c.b16 %v2040, %v2039
          %v2055 = vpack.c.b16 %v2042, %v2041
          %v2056 = vpack.c.b16 %v2044, %v2043
          %v2057 = vpack.c.b16 %v2046, %v2045
          %v2058 = vpack.c.b16 %v2048, %v2047
          %v2059 = vpack.c.b16 %v2050, %v2049
          %v2060 = vpack.c.b16 %v2052, %v2051
          %2069 = vmatprep.subr.bf16.mxu0 0
          %2070 = vmatpush1.bf16.msra.mxu0 %v2053
          %2071 = vmatprep.subr.bf16.mxu0 0
          %2072 = vmatpush1.bf16.msra.mxu0 %v2054
          %2073 = vmatprep.subr.bf16.mxu0 0
          %2074 = vmatpush1.bf16.msra.mxu0 %v2055
          %2075 = vmatprep.subr.bf16.mxu0 0
          %2076 = vmatpush1.bf16.msra.mxu0 %v2056
          %2077 = vmatprep.subr.bf16.mxu0 0
          %2078 = vmatpush1.bf16.msra.mxu0 %v2057
          %2079 = vmatprep.subr.bf16.mxu0 0
          %2080 = vmatpush1.bf16.msra.mxu0 %v2058
          %2081 = vmatprep.subr.bf16.mxu0 0
          %2082 = vmatpush1.bf16.msra.mxu0 %v2059
          %2083 = vmatprep.subr.bf16.mxu0 0
          %2084 = vmatpush1.bf16.msra.mxu0 %v2060
          %2085 = vmatprep.subr.bf16.mxu0 0
          %2086 = vmatpush1.bf16.msra.mxu0 0
          %2087 = vmatprep.subr.bf16.mxu0 0
          %2088 = vmatpush1.bf16.msra.mxu0 0
          %2089 = vmatprep.subr.bf16.mxu0 0
          %2090 = vmatpush1.bf16.msra.mxu0 0
          %2091 = vmatprep.subr.bf16.mxu0 0
          %2092 = vmatpush1.bf16.msra.mxu0 0
          %2093 = vmatprep.subr.bf16.mxu0 0
          %2094 = vmatpush1.bf16.msra.mxu0 0
          %2095 = vmatprep.subr.bf16.mxu0 0
          %2096 = vmatpush1.bf16.msra.mxu0 0
          %2097 = vmatprep.subr.bf16.mxu0 0
          %2098 = vmatpush1.bf16.msra.mxu0 0
          %2099 = vmatprep.subr.bf16.mxu0 0
          %2100 = vmatpush1.bf16.msra.mxu0 0
          %2101 = vmatprep.mubr.bf16.mxu0 0
          %2102 = vmatmul.mubr.bf16.gmra.mrb[0].mxu0 %v1989
          %v2103 = vpop.f32.mrb[0].mxu0
          %v2104 = vadd.f32 0.0, %v2103
          %v2105 = vpop.f32.mrb[0].mxu0
          %v2106 = vpop.f32.mrb[0].mxu0
          %v2107 = vadd.f32 0.0, %v2106
          %v2108 = vpop.f32.mrb[0].mxu0
          %2109 = vmatprep.mubr.bf16.mxu0 0
          %2110 = vmatmul.mubr.bf16.gmra.mrb[0].mxu0 %v1990
          %v2111 = vpop.f32.mrb[0].mxu0
          %v2112 = vadd.f32 0.0, %v2111
          %v2113 = vpop.f32.mrb[0].mxu0
          %v2114 = vpop.f32.mrb[0].mxu0
          %v2115 = vadd.f32 0.0, %v2114
          %v2116 = vpop.f32.mrb[0].mxu0
          %2117 = vmatprep.mubr.bf16.mxu0 0
          %2118 = vmatmul.mubr.bf16.gmra.mrb[0].mxu0 %v1991
          %v2119 = vpop.f32.mrb[0].mxu0
          %v2120 = vadd.f32 0.0, %v2119
          %v2121 = vpop.f32.mrb[0].mxu0
          %v2122 = vpop.f32.mrb[0].mxu0
          %v2123 = vadd.f32 0.0, %v2122
          %v2124 = vpop.f32.mrb[0].mxu0
          %2125 = vmatprep.mubr.bf16.mxu0 0
          %2126 = vmatmul.mubr.bf16.gmra.mrb[0].mxu0 %v1992
          %v2127 = vpop.f32.mrb[0].mxu0
          %v2128 = vadd.f32 0.0, %v2127
          %v2129 = vpop.f32.mrb[0].mxu0
          %v2130 = vpop.f32.mrb[0].mxu0
          %v2131 = vadd.f32 0.0, %v2130
          %v2132 = vpop.f32.mrb[0].mxu0
          %2133 = vmatprep.mubr.bf16.mxu0 0
          %2134 = vmatmul.mubr.bf16.gmra.mrb[0].mxu0 %v1993
          %v2135 = vpop.f32.mrb[0].mxu0
          %v2136 = vadd.f32 0.0, %v2135
          %v2137 = vpop.f32.mrb[0].mxu0
          %v2138 = vpop.f32.mrb[0].mxu0
          %v2139 = vadd.f32 0.0, %v2138
          %v2140 = vpop.f32.mrb[0].mxu0
          %2141 = vmatprep.mubr.bf16.mxu0 0
          %2142 = vmatmul.mubr.bf16.gmra.mrb[0].mxu0 %v1994
          %v2143 = vpop.f32.mrb[0].mxu0
          %v2144 = vadd.f32 0.0, %v2143
          %v2145 = vpop.f32.mrb[0].mxu0
          %v2146 = vpop.f32.mrb[0].mxu0
          %v2147 = vadd.f32 0.0, %v2146
          %v2148 = vpop.f32.mrb[0].mxu0
          %2149 = vmatprep.mubr.bf16.mxu0 0
          %2150 = vmatmul.mubr.bf16.gmra.mrb[0].mxu0 %v1995
          %v2151 = vpop.f32.mrb[0].mxu0
          %v2152 = vadd.f32 0.0, %v2151
          %v2153 = vpop.f32.mrb[0].mxu0
          %v2154 = vpop.f32.mrb[0].mxu0
          %v2155 = vadd.f32 0.0, %v2154
          %v2156 = vpop.f32.mrb[0].mxu0
          %2157 = vmatprep.mubr.bf16.mxu0 0
          %2158 = vmatmul.mubr.bf16.gmra.mrb[0].mxu0 %v1996
          %v2159 = vpop.f32.mrb[0].mxu0
          %v2160 = vadd.f32 0.0, %v2159
          %v2161 = vpop.f32.mrb[0].mxu0
          %v2162 = vpop.f32.mrb[0].mxu0
          %v2163 = vadd.f32 0.0, %v2162
          %v2164 = vpop.f32.mrb[0].mxu0
          %2165 = vmatprep.mubr.bf16.mxu0 0
          %2166 = vmatmul.mubr.bf16.gmra.mrb[0].mxu0 %v1997
          %v2167 = vpop.f32.mrb[0].mxu0
          %v2168 = vadd.f32 0.0, %v2167
          %v2169 = vpop.f32.mrb[0].mxu0
          %v2170 = vpop.f32.mrb[0].mxu0
          %v2171 = vadd.f32 0.0, %v2170
          %v2172 = vpop.f32.mrb[0].mxu0
          %2173 = vmatprep.mubr.bf16.mxu0 0
          %2174 = vmatmul.mubr.bf16.gmra.mrb[0].mxu0 %v1998
          %v2175 = vpop.f32.mrb[0].mxu0
          %v2176 = vadd.f32 0.0, %v2175
          %v2177 = vpop.f32.mrb[0].mxu0
          %v2178 = vpop.f32.mrb[0].mxu0
          %v2179 = vadd.f32 0.0, %v2178
          %v2180 = vpop.f32.mrb[0].mxu0
          %2181 = vmatprep.mubr.bf16.mxu0 0
          %2182 = vmatmul.mubr.bf16.gmra.mrb[0].mxu0 %v1999
          %v2183 = vpop.f32.mrb[0].mxu0
          %v2184 = vadd.f32 0.0, %v2183
          %v2185 = vpop.f32.mrb[0].mxu0
          %v2186 = vpop.f32.mrb[0].mxu0
          %v2187 = vadd.f32 0.0, %v2186
          %v2188 = vpop.f32.mrb[0].mxu0
          %2189 = vmatprep.mubr.bf16.mxu0 0
          %2190 = vmatmul.mubr.bf16.gmra.mrb[0].mxu0 %v2000
          %v2191 = vpop.f32.mrb[0].mxu0
          %v2192 = vadd.f32 0.0, %v2191
          %v2193 = vpop.f32.mrb[0].mxu0
          %v2194 = vpop.f32.mrb[0].mxu0
          %v2195 = vadd.f32 0.0, %v2194
          %v2196 = vpop.f32.mrb[0].mxu0
          %2197 = vmatprep.mubr.bf16.mxu0 0
          %2198 = vmatmul.mubr.bf16.gmra.mrb[0].mxu0 %v2001
          %v2199 = vpop.f32.mrb[0].mxu0
          %v2200 = vadd.f32 0.0, %v2199
          %v2201 = vpop.f32.mrb[0].mxu0
          %v2202 = vpop.f32.mrb[0].mxu0
          %v2203 = vadd.f32 0.0, %v2202
          %v2204 = vpop.f32.mrb[0].mxu0
          %2205 = vmatprep.mubr.bf16.mxu0 0
          %2206 = vmatmul.mubr.bf16.gmra.mrb[0].mxu0 %v2002
          %v2207 = vpop.f32.mrb[0].mxu0
          %v2208 = vadd.f32 0.0, %v2207
          %v2209 = vpop.f32.mrb[0].mxu0
          %v2210 = vpop.f32.mrb[0].mxu0
          %v2211 = vadd.f32 0.0, %v2210
          %v2212 = vpop.f32.mrb[0].mxu0
          %2213 = vmatprep.mubr.bf16.mxu0 0
          %2214 = vmatmul.mubr.bf16.gmra.mrb[0].mxu0 %v2003
          %v2215 = vpop.f32.mrb[0].mxu0
          %v2216 = vadd.f32 0.0, %v2215
          %v2217 = vpop.f32.mrb[0].mxu0
          %v2218 = vpop.f32.mrb[0].mxu0
          %v2219 = vadd.f32 0.0, %v2218
          %v2220 = vpop.f32.mrb[0].mxu0
          %2221 = vmatprep.mubr.bf16.mxu0 0
          %2222 = vmatmul.mubr.bf16.gmra.mrb[0].mxu0 %v2004
          %v2223 = vpop.f32.mrb[0].mxu0
          %v2224 = vadd.f32 0.0, %v2223
          %v2225 = vpop.f32.mrb[0].mxu0
          %v2226 = vpop.f32.mrb[0].mxu0
          %v2227 = vadd.f32 0.0, %v2226
          %v2228 = vpop.f32.mrb[0].mxu0
          %2229 = vdwg.mxu0
          %v2246 = vunpack.c.l.b16 %v1973
          %v2247 = vunpack.c.l.b16 %v1974
          %v2248 = vunpack.c.l.b16 %v1975
          %v2249 = vunpack.c.l.b16 %v1976
          %v2250 = vunpack.c.l.b16 %v1977
          %v2251 = vunpack.c.l.b16 %v1978
          %v2252 = vunpack.c.l.b16 %v1979
          %v2253 = vunpack.c.l.b16 %v1980
          %v2254 = vunpack.c.l.b16 %v1981
          %v2255 = vunpack.c.l.b16 %v1982
          %v2256 = vunpack.c.l.b16 %v1983
          %v2257 = vunpack.c.l.b16 %v1984
          %v2258 = vunpack.c.l.b16 %v1985
          %v2259 = vunpack.c.l.b16 %v1986
          %v2260 = vunpack.c.l.b16 %v1987
          %v2261 = vunpack.c.l.b16 %v1988
          %v2262 = vpack.c.b16 %v2247, %v2246
          %v2263 = vpack.c.b16 %v2249, %v2248
          %v2264 = vpack.c.b16 %v2251, %v2250
          %v2265 = vpack.c.b16 %v2253, %v2252
          %v2266 = vpack.c.b16 %v2255, %v2254
          %v2267 = vpack.c.b16 %v2257, %v2256
          %v2268 = vpack.c.b16 %v2259, %v2258
          %v2269 = vpack.c.b16 %v2261, %v2260
          %2278 = vmatprep.subr.bf16.mxu0 0
          %2279 = vmatpush1.bf16.msra.mxu0 %v2262
          %2280 = vmatprep.subr.bf16.mxu0 0
          %2281 = vmatpush1.bf16.msra.mxu0 %v2263
          %2282 = vmatprep.subr.bf16.mxu0 0
          %2283 = vmatpush1.bf16.msra.mxu0 %v2264
          %2284 = vmatprep.subr.bf16.mxu0 0
          %2285 = vmatpush1.bf16.msra.mxu0 %v2265
          %2286 = vmatprep.subr.bf16.mxu0 0
          %2287 = vmatpush1.bf16.msra.mxu0 %v2266
          %2288 = vmatprep.subr.bf16.mxu0 0
          %2289 = vmatpush1.bf16.msra.mxu0 %v2267
          %2290 = vmatprep.subr.bf16.mxu0 0
          %2291 = vmatpush1.bf16.msra.mxu0 %v2268
          %2292 = vmatprep.subr.bf16.mxu0 0
          %2293 = vmatpush1.bf16.msra.mxu0 %v2269
          %2294 = vmatprep.subr.bf16.mxu0 0
          %2295 = vmatpush1.bf16.msra.mxu0 0
          %2296 = vmatprep.subr.bf16.mxu0 0
          %2297 = vmatpush1.bf16.msra.mxu0 0
          %2298 = vmatprep.subr.bf16.mxu0 0
          %2299 = vmatpush1.bf16.msra.mxu0 0
          %2300 = vmatprep.subr.bf16.mxu0 0
          %2301 = vmatpush1.bf16.msra.mxu0 0
          %2302 = vmatprep.subr.bf16.mxu0 0
          %2303 = vmatpush1.bf16.msra.mxu0 0
          %2304 = vmatprep.subr.bf16.mxu0 0
          %2305 = vmatpush1.bf16.msra.mxu0 0
          %2306 = vmatprep.subr.bf16.mxu0 0
          %2307 = vmatpush1.bf16.msra.mxu0 0
          %2308 = vmatprep.subr.bf16.mxu0 0
          %2309 = vmatpush1.bf16.msra.mxu0 0
          %2310 = vmatprep.mubr.bf16.mxu0 0
          %2311 = vmatmul.mubr.bf16.gmra.mrb[0].mxu0 %v1957
          %v2312 = vpop.f32.mrb[0].mxu0
          %v2313 = vadd.f32 %v2104, %v2312
          %v2314 = vpop.f32.mrb[0].mxu0
          %v2315 = vpop.f32.mrb[0].mxu0
          %v2316 = vadd.f32 %v2107, %v2315
          %v2317 = vpop.f32.mrb[0].mxu0
          %2318 = vmatprep.mubr.bf16.mxu0 0
          %2319 = vmatmul.mubr.bf16.gmra.mrb[0].mxu0 %v1958
          %v2320 = vpop.f32.mrb[0].mxu0
          %v2321 = vadd.f32 %v2112, %v2320
          %v2322 = vpop.f32.mrb[0].mxu0
          %v2323 = vpop.f32.mrb[0].mxu0
          %v2324 = vadd.f32 %v2115, %v2323
          %v2325 = vpop.f32.mrb[0].mxu0
          %2326 = vmatprep.mubr.bf16.mxu0 0
          %2327 = vmatmul.mubr.bf16.gmra.mrb[0].mxu0 %v1959
          %v2328 = vpop.f32.mrb[0].mxu0
          %v2329 = vadd.f32 %v2120, %v2328
          %v2330 = vpop.f32.mrb[0].mxu0
          %v2331 = vpop.f32.mrb[0].mxu0
          %v2332 = vadd.f32 %v2123, %v2331
          %v2333 = vpop.f32.mrb[0].mxu0
          %2334 = vmatprep.mubr.bf16.mxu0 0
          %2335 = vmatmul.mubr.bf16.gmra.mrb[0].mxu0 %v1960
          %v2336 = vpop.f32.mrb[0].mxu0
          %v2337 = vadd.f32 %v2128, %v2336
          %v2338 = vpop.f32.mrb[0].mxu0
          %v2339 = vpop.f32.mrb[0].mxu0
          %v2340 = vadd.f32 %v2131, %v2339
          %v2341 = vpop.f32.mrb[0].mxu0
          %2342 = vmatprep.mubr.bf16.mxu0 0
          %2343 = vmatmul.mubr.bf16.gmra.mrb[0].mxu0 %v1961
          %v2344 = vpop.f32.mrb[0].mxu0
          %v2345 = vadd.f32 %v2136, %v2344
          %v2346 = vpop.f32.mrb[0].mxu0
          %v2347 = vpop.f32.mrb[0].mxu0
          %v2348 = vadd.f32 %v2139, %v2347
          %v2349 = vpop.f32.mrb[0].mxu0
          %2350 = vmatprep.mubr.bf16.mxu0 0
          %2351 = vmatmul.mubr.bf16.gmra.mrb[0].mxu0 %v1962
          %v2352 = vpop.f32.mrb[0].mxu0
          %v2353 = vadd.f32 %v2144, %v2352
          %v2354 = vpop.f32.mrb[0].mxu0
          %v2355 = vpop.f32.mrb[0].mxu0
          %v2356 = vadd.f32 %v2147, %v2355
          %v2357 = vpop.f32.mrb[0].mxu0
          %2358 = vmatprep.mubr.bf16.mxu0 0
          %2359 = vmatmul.mubr.bf16.gmra.mrb[0].mxu0 %v1963
          %v2360 = vpop.f32.mrb[0].mxu0
          %v2361 = vadd.f32 %v2152, %v2360
          %v2362 = vpop.f32.mrb[0].mxu0
          %v2363 = vpop.f32.mrb[0].mxu0
          %v2364 = vadd.f32 %v2155, %v2363
          %v2365 = vpop.f32.mrb[0].mxu0
          %2366 = vmatprep.mubr.bf16.mxu0 0
          %2367 = vmatmul.mubr.bf16.gmra.mrb[0].mxu0 %v1964
          %v2368 = vpop.f32.mrb[0].mxu0
          %v2369 = vadd.f32 %v2160, %v2368
          %v2370 = vpop.f32.mrb[0].mxu0
          %v2371 = vpop.f32.mrb[0].mxu0
          %v2372 = vadd.f32 %v2163, %v2371
          %v2373 = vpop.f32.mrb[0].mxu0
          %2374 = vmatprep.mubr.bf16.mxu0 0
          %2375 = vmatmul.mubr.bf16.gmra.mrb[0].mxu0 %v1965
          %v2376 = vpop.f32.mrb[0].mxu0
          %v2377 = vadd.f32 %v2168, %v2376
          %v2378 = vpop.f32.mrb[0].mxu0
          %v2379 = vpop.f32.mrb[0].mxu0
          %v2380 = vadd.f32 %v2171, %v2379
          %v2381 = vpop.f32.mrb[0].mxu0
          %2382 = vmatprep.mubr.bf16.mxu0 0
          %2383 = vmatmul.mubr.bf16.gmra.mrb[0].mxu0 %v1966
          %v2384 = vpop.f32.mrb[0].mxu0
          %v2385 = vadd.f32 %v2176, %v2384
          %v2386 = vpop.f32.mrb[0].mxu0
          %v2387 = vpop.f32.mrb[0].mxu0
          %v2388 = vadd.f32 %v2179, %v2387
          %v2389 = vpop.f32.mrb[0].mxu0
          %2390 = vmatprep.mubr.bf16.mxu0 0
          %2391 = vmatmul.mubr.bf16.gmra.mrb[0].mxu0 %v1967
          %v2392 = vpop.f32.mrb[0].mxu0
          %v2393 = vadd.f32 %v2184, %v2392
          %v2394 = vpop.f32.mrb[0].mxu0
          %v2395 = vpop.f32.mrb[0].mxu0
          %v2396 = vadd.f32 %v2187, %v2395
          %v2397 = vpop.f32.mrb[0].mxu0
          %2398 = vmatprep.mubr.bf16.mxu0 0
          %2399 = vmatmul.mubr.bf16.gmra.mrb[0].mxu0 %v1968
          %v2400 = vpop.f32.mrb[0].mxu0
          %v2401 = vadd.f32 %v2192, %v2400
          %v2402 = vpop.f32.mrb[0].mxu0
          %v2403 = vpop.f32.mrb[0].mxu0
          %v2404 = vadd.f32 %v2195, %v2403
          %v2405 = vpop.f32.mrb[0].mxu0
          %2406 = vmatprep.mubr.bf16.mxu0 0
          %2407 = vmatmul.mubr.bf16.gmra.mrb[0].mxu0 %v1969
          %v2408 = vpop.f32.mrb[0].mxu0
          %v2409 = vadd.f32 %v2200, %v2408
          %v2410 = vpop.f32.mrb[0].mxu0
          %v2411 = vpop.f32.mrb[0].mxu0
          %v2412 = vadd.f32 %v2203, %v2411
          %v2413 = vpop.f32.mrb[0].mxu0
          %2414 = vmatprep.mubr.bf16.mxu0 0
          %2415 = vmatmul.mubr.bf16.gmra.mrb[0].mxu0 %v1970
          %v2416 = vpop.f32.mrb[0].mxu0
          %v2417 = vadd.f32 %v2208, %v2416
          %v2418 = vpop.f32.mrb[0].mxu0
          %v2419 = vpop.f32.mrb[0].mxu0
          %v2420 = vadd.f32 %v2211, %v2419
          %v2421 = vpop.f32.mrb[0].mxu0
          %2422 = vmatprep.mubr.bf16.mxu0 0
          %2423 = vmatmul.mubr.bf16.gmra.mrb[0].mxu0 %v1971
          %v2424 = vpop.f32.mrb[0].mxu0
          %v2425 = vadd.f32 %v2216, %v2424
          %v2426 = vpop.f32.mrb[0].mxu0
          %v2427 = vpop.f32.mrb[0].mxu0
          %v2428 = vadd.f32 %v2219, %v2427
          %v2429 = vpop.f32.mrb[0].mxu0
          %2430 = vmatprep.mubr.bf16.mxu0 0
          %2431 = vmatmul.mubr.bf16.gmra.mrb[0].mxu0 %v1972
          %v2432 = vpop.f32.mrb[0].mxu0
          %v2433 = vadd.f32 %v2224, %v2432
          %v2434 = vpop.f32.mrb[0].mxu0
          %v2435 = vpop.f32.mrb[0].mxu0
          %v2436 = vadd.f32 %v2227, %v2435
          %v2437 = vpop.f32.mrb[0].mxu0
          %2438 = vdwg.mxu0
          %v2439 = vld [vmem:[%s7] sm:$0x1]
          %v2441 = vlaneseq
          %v2442 = vshrl.u32 %v2441, 7
          %v2443 = vsub.s32 0, %v2442
          %v2444 = vrot.slane %v2439, %v2443
          %v2446 = vadd.f32 %v2313, %v2444
          %v2447 = vadd.f32 %v2316, %v2444
          %v2448 = vadd.f32 %v2321, %v2444
          %v2449 = vadd.f32 %v2324, %v2444
          %v2450 = vadd.f32 %v2329, %v2444
          %v2451 = vadd.f32 %v2332, %v2444
          %v2452 = vadd.f32 %v2337, %v2444
          %v2453 = vadd.f32 %v2340, %v2444
          %v2454 = vadd.f32 %v2345, %v2444
          %v2455 = vadd.f32 %v2348, %v2444
          %v2456 = vadd.f32 %v2353, %v2444
          %v2457 = vadd.f32 %v2356, %v2444
          %v2458 = vadd.f32 %v2361, %v2444
          %v2459 = vadd.f32 %v2364, %v2444
          %v2460 = vadd.f32 %v2369, %v2444
          %v2461 = vadd.f32 %v2372, %v2444
          %v2462 = vadd.f32 %v2377, %v2444
          %v2463 = vadd.f32 %v2380, %v2444
          %v2464 = vadd.f32 %v2385, %v2444
          %v2465 = vadd.f32 %v2388, %v2444
          %v2466 = vadd.f32 %v2393, %v2444
          %v2467 = vadd.f32 %v2396, %v2444
          %v2468 = vadd.f32 %v2401, %v2444
          %v2469 = vadd.f32 %v2404, %v2444
          %v2470 = vadd.f32 %v2409, %v2444
          %v2471 = vadd.f32 %v2412, %v2444
          %v2472 = vadd.f32 %v2417, %v2444
          %v2473 = vadd.f32 %v2420, %v2444
          %v2474 = vadd.f32 %v2425, %v2444
          %v2475 = vadd.f32 %v2428, %v2444
          %v2476 = vadd.f32 %v2433, %v2444
          %v2477 = vadd.f32 %v2436, %v2444
          %v2478 = vlaneseq
          %v2479 = vand.u32 %v2478, 127
          %vm2480 = vcmp.lt.s32.totalorder %v2479, 8
          %v2481 = vsel %vm2480, %v2446, -1e+30
          %v2482 = vsel %vm2480, %v2447, -1e+30
          %v2483 = vsel %vm2480, %v2448, -1e+30
          %v2484 = vsel %vm2480, %v2449, -1e+30
          %v2485 = vsel %vm2480, %v2450, -1e+30
          %v2486 = vsel %vm2480, %v2451, -1e+30
          %v2487 = vsel %vm2480, %v2452, -1e+30
          %v2488 = vsel %vm2480, %v2453, -1e+30
          %v2489 = vsel %vm2480, %v2454, -1e+30
          %v2490 = vsel %vm2480, %v2455, -1e+30
          %v2491 = vsel %vm2480, %v2456, -1e+30
          %v2492 = vsel %vm2480, %v2457, -1e+30
          %v2493 = vsel %vm2480, %v2458, -1e+30
          %v2494 = vsel %vm2480, %v2459, -1e+30
          %v2495 = vsel %vm2480, %v2460, -1e+30
          %v2496 = vsel %vm2480, %v2461, -1e+30
          %v2497 = vsel %vm2480, %v2462, -1e+30
          %v2498 = vsel %vm2480, %v2463, -1e+30
          %v2499 = vsel %vm2480, %v2464, -1e+30
          %v2500 = vsel %vm2480, %v2465, -1e+30
          %v2501 = vsel %vm2480, %v2466, -1e+30
          %v2502 = vsel %vm2480, %v2467, -1e+30
          %v2503 = vsel %vm2480, %v2468, -1e+30
          %v2504 = vsel %vm2480, %v2469, -1e+30
          %v2505 = vsel %vm2480, %v2470, -1e+30
          %v2506 = vsel %vm2480, %v2471, -1e+30
          %v2507 = vsel %vm2480, %v2472, -1e+30
          %v2508 = vsel %vm2480, %v2473, -1e+30
          %v2509 = vsel %vm2480, %v2474, -1e+30
          %v2510 = vsel %vm2480, %v2475, -1e+30
          %v2511 = vsel %vm2480, %v2476, -1e+30
          %v2512 = vsel %vm2480, %v2477, -1e+30
          %2513 = vmax.xlane.f32.xlu0 %v2481
          %v2514 = vpop.xlane.xlu0 %2513
          %2515 = vmax.xlane.f32.xlu0 %v2482
          %v2516 = vpop.xlane.xlu0 %2515
          %2517 = vmax.xlane.f32.xlu0 %v2483
          %v2518 = vpop.xlane.xlu0 %2517
          %2519 = vmax.xlane.f32.xlu0 %v2484
          %v2520 = vpop.xlane.xlu0 %2519
          %2521 = vmax.xlane.f32.xlu0 %v2485
          %v2522 = vpop.xlane.xlu0 %2521
          %2523 = vmax.xlane.f32.xlu0 %v2486
          %v2524 = vpop.xlane.xlu0 %2523
          %2525 = vmax.xlane.f32.xlu0 %v2487
          %v2526 = vpop.xlane.xlu0 %2525
          %2527 = vmax.xlane.f32.xlu0 %v2488
          %v2528 = vpop.xlane.xlu0 %2527
          %2529 = vmax.xlane.f32.xlu0 %v2489
          %v2530 = vpop.xlane.xlu0 %2529
          %2531 = vmax.xlane.f32.xlu0 %v2490
          %v2532 = vpop.xlane.xlu0 %2531
          %2533 = vmax.xlane.f32.xlu0 %v2491
          %v2534 = vpop.xlane.xlu0 %2533
          %2535 = vmax.xlane.f32.xlu0 %v2492
          %v2536 = vpop.xlane.xlu0 %2535
          %2537 = vmax.xlane.f32.xlu0 %v2493
          %v2538 = vpop.xlane.xlu0 %2537
          %2539 = vmax.xlane.f32.xlu0 %v2494
          %v2540 = vpop.xlane.xlu0 %2539
          %2541 = vmax.xlane.f32.xlu0 %v2495
          %v2542 = vpop.xlane.xlu0 %2541
          %2543 = vmax.xlane.f32.xlu0 %v2496
          %v2544 = vpop.xlane.xlu0 %2543
          %2545 = vmax.xlane.f32.xlu0 %v2497
          %v2546 = vpop.xlane.xlu0 %2545
          %2547 = vmax.xlane.f32.xlu0 %v2498
          %v2548 = vpop.xlane.xlu0 %2547
          %2549 = vmax.xlane.f32.xlu0 %v2499
          %v2550 = vpop.xlane.xlu0 %2549
          %2551 = vmax.xlane.f32.xlu0 %v2500
          %v2552 = vpop.xlane.xlu0 %2551
          %2553 = vmax.xlane.f32.xlu0 %v2501
          %v2554 = vpop.xlane.xlu0 %2553
          %2555 = vmax.xlane.f32.xlu0 %v2502
          %v2556 = vpop.xlane.xlu0 %2555
          %2557 = vmax.xlane.f32.xlu0 %v2503
          %v2558 = vpop.xlane.xlu0 %2557
          %2559 = vmax.xlane.f32.xlu0 %v2504
          %v2560 = vpop.xlane.xlu0 %2559
          %2561 = vmax.xlane.f32.xlu0 %v2505
          %v2562 = vpop.xlane.xlu0 %2561
          %2563 = vmax.xlane.f32.xlu0 %v2506
          %v2564 = vpop.xlane.xlu0 %2563
          %2565 = vmax.xlane.f32.xlu0 %v2507
          %v2566 = vpop.xlane.xlu0 %2565
          %2567 = vmax.xlane.f32.xlu0 %v2508
          %v2568 = vpop.xlane.xlu0 %2567
          %2569 = vmax.xlane.f32.xlu0 %v2509
          %v2570 = vpop.xlane.xlu0 %2569
          %2571 = vmax.xlane.f32.xlu0 %v2510
          %v2572 = vpop.xlane.xlu0 %2571
          %2573 = vmax.xlane.f32.xlu0 %v2511
          %v2574 = vpop.xlane.xlu0 %2573
          %2575 = vmax.xlane.f32.xlu0 %v2512
          %v2576 = vpop.xlane.xlu0 %2575
          %v2577 = vsub.f32 %v2481, %v2514
          %v2578 = vsub.f32 %v2482, %v2516
          %v2579 = vsub.f32 %v2483, %v2518
          %v2580 = vsub.f32 %v2484, %v2520
          %v2581 = vsub.f32 %v2485, %v2522
          %v2582 = vsub.f32 %v2486, %v2524
          %v2583 = vsub.f32 %v2487, %v2526
          %v2584 = vsub.f32 %v2488, %v2528
          %v2585 = vsub.f32 %v2489, %v2530
          %v2586 = vsub.f32 %v2490, %v2532
          %v2587 = vsub.f32 %v2491, %v2534
          %v2588 = vsub.f32 %v2492, %v2536
          %v2589 = vsub.f32 %v2493, %v2538
          %v2590 = vsub.f32 %v2494, %v2540
          %v2591 = vsub.f32 %v2495, %v2542
          %v2592 = vsub.f32 %v2496, %v2544
          %v2593 = vsub.f32 %v2497, %v2546
          %v2594 = vsub.f32 %v2498, %v2548
          %v2595 = vsub.f32 %v2499, %v2550
          %v2596 = vsub.f32 %v2500, %v2552
          %v2597 = vsub.f32 %v2501, %v2554
          %v2598 = vsub.f32 %v2502, %v2556
          %v2599 = vsub.f32 %v2503, %v2558
          %v2600 = vsub.f32 %v2504, %v2560
          %v2601 = vsub.f32 %v2505, %v2562
          %v2602 = vsub.f32 %v2506, %v2564
          %v2603 = vsub.f32 %v2507, %v2566
          %v2604 = vsub.f32 %v2508, %v2568
          %v2605 = vsub.f32 %v2509, %v2570
          %v2606 = vsub.f32 %v2510, %v2572
          %v2607 = vsub.f32 %v2511, %v2574
          %v2608 = vsub.f32 %v2512, %v2576
          %v2609 = vmul.f32 %v2577, 1.442695
          %v2610 = vpow.pop %v2609
          %v2611 = vmul.f32 %v2578, 1.442695
          %v2612 = vpow.pop %v2611
          %v2613 = vmul.f32 %v2579, 1.442695
          %v2614 = vpow.pop %v2613
          %v2615 = vmul.f32 %v2580, 1.442695
          %v2616 = vpow.pop %v2615
          %v2617 = vmul.f32 %v2581, 1.442695
          %v2618 = vpow.pop %v2617
          %v2619 = vmul.f32 %v2582, 1.442695
          %v2620 = vpow.pop %v2619
          %v2621 = vmul.f32 %v2583, 1.442695
          %v2622 = vpow.pop %v2621
          %v2623 = vmul.f32 %v2584, 1.442695
          %v2624 = vpow.pop %v2623
          %v2625 = vmul.f32 %v2585, 1.442695
          %v2626 = vpow.pop %v2625
          %v2627 = vmul.f32 %v2586, 1.442695
          %v2628 = vpow.pop %v2627
          %v2629 = vmul.f32 %v2587, 1.442695
          %v2630 = vpow.pop %v2629
          %v2631 = vmul.f32 %v2588, 1.442695
          %v2632 = vpow.pop %v2631
          %v2633 = vmul.f32 %v2589, 1.442695
          %v2634 = vpow.pop %v2633
          %v2635 = vmul.f32 %v2590, 1.442695
          %v2636 = vpow.pop %v2635
          %v2637 = vmul.f32 %v2591, 1.442695
          %v2638 = vpow.pop %v2637
          %v2639 = vmul.f32 %v2592, 1.442695
          %v2640 = vpow.pop %v2639
          %v2641 = vmul.f32 %v2593, 1.442695
          %v2642 = vpow.pop %v2641
          %v2643 = vmul.f32 %v2594, 1.442695
          %v2644 = vpow.pop %v2643
          %v2645 = vmul.f32 %v2595, 1.442695
          %v2646 = vpow.pop %v2645
          %v2647 = vmul.f32 %v2596, 1.442695
          %v2648 = vpow.pop %v2647
          %v2649 = vmul.f32 %v2597, 1.442695
          %v2650 = vpow.pop %v2649
          %v2651 = vmul.f32 %v2598, 1.442695
          %v2652 = vpow.pop %v2651
          %v2653 = vmul.f32 %v2599, 1.442695
          %v2654 = vpow.pop %v2653
          %v2655 = vmul.f32 %v2600, 1.442695
          %v2656 = vpow.pop %v2655
          %v2657 = vmul.f32 %v2601, 1.442695
          %v2658 = vpow.pop %v2657
          %v2659 = vmul.f32 %v2602, 1.442695
          %v2660 = vpow.pop %v2659
          %v2661 = vmul.f32 %v2603, 1.442695
          %v2662 = vpow.pop %v2661
          %v2663 = vmul.f32 %v2604, 1.442695
          %v2664 = vpow.pop %v2663
          %v2665 = vmul.f32 %v2605, 1.442695
          %v2666 = vpow.pop %v2665
          %v2667 = vmul.f32 %v2606, 1.442695
          %v2668 = vpow.pop %v2667
          %v2669 = vmul.f32 %v2607, 1.442695
          %v2670 = vpow.pop %v2669
          %v2671 = vmul.f32 %v2608, 1.442695
          %v2672 = vpow.pop %v2671
          %2673 = vadd.xlane.f32.xlu0 %v2610
          %v2674 = vpop.xlane.xlu0 %2673
          %2675 = vadd.xlane.f32.xlu0 %v2612
          %v2676 = vpop.xlane.xlu0 %2675
          %2677 = vadd.xlane.f32.xlu0 %v2614
          %v2678 = vpop.xlane.xlu0 %2677
          %2679 = vadd.xlane.f32.xlu0 %v2616
          %v2680 = vpop.xlane.xlu0 %2679
          %2681 = vadd.xlane.f32.xlu0 %v2618
          %v2682 = vpop.xlane.xlu0 %2681
          %2683 = vadd.xlane.f32.xlu0 %v2620
          %v2684 = vpop.xlane.xlu0 %2683
          %2685 = vadd.xlane.f32.xlu0 %v2622
          %v2686 = vpop.xlane.xlu0 %2685
          %2687 = vadd.xlane.f32.xlu0 %v2624
          %v2688 = vpop.xlane.xlu0 %2687
          %2689 = vadd.xlane.f32.xlu0 %v2626
          %v2690 = vpop.xlane.xlu0 %2689
          %2691 = vadd.xlane.f32.xlu0 %v2628
          %v2692 = vpop.xlane.xlu0 %2691
          %2693 = vadd.xlane.f32.xlu0 %v2630
          %v2694 = vpop.xlane.xlu0 %2693
          %2695 = vadd.xlane.f32.xlu0 %v2632
          %v2696 = vpop.xlane.xlu0 %2695
          %2697 = vadd.xlane.f32.xlu0 %v2634
          %v2698 = vpop.xlane.xlu0 %2697
          %2699 = vadd.xlane.f32.xlu0 %v2636
          %v2700 = vpop.xlane.xlu0 %2699
          %2701 = vadd.xlane.f32.xlu0 %v2638
          %v2702 = vpop.xlane.xlu0 %2701
          %2703 = vadd.xlane.f32.xlu0 %v2640
          %v2704 = vpop.xlane.xlu0 %2703
          %2705 = vadd.xlane.f32.xlu0 %v2642
          %v2706 = vpop.xlane.xlu0 %2705
          %2707 = vadd.xlane.f32.xlu0 %v2644
          %v2708 = vpop.xlane.xlu0 %2707
          %2709 = vadd.xlane.f32.xlu0 %v2646
          %v2710 = vpop.xlane.xlu0 %2709
          %2711 = vadd.xlane.f32.xlu0 %v2648
          %v2712 = vpop.xlane.xlu0 %2711
          %2713 = vadd.xlane.f32.xlu0 %v2650
          %v2714 = vpop.xlane.xlu0 %2713
          %2715 = vadd.xlane.f32.xlu0 %v2652
          %v2716 = vpop.xlane.xlu0 %2715
          %2717 = vadd.xlane.f32.xlu0 %v2654
          %v2718 = vpop.xlane.xlu0 %2717
          %2719 = vadd.xlane.f32.xlu0 %v2656
          %v2720 = vpop.xlane.xlu0 %2719
          %2721 = vadd.xlane.f32.xlu0 %v2658
          %v2722 = vpop.xlane.xlu0 %2721
          %2723 = vadd.xlane.f32.xlu0 %v2660
          %v2724 = vpop.xlane.xlu0 %2723
          %2725 = vadd.xlane.f32.xlu0 %v2662
          %v2726 = vpop.xlane.xlu0 %2725
          %2727 = vadd.xlane.f32.xlu0 %v2664
          %v2728 = vpop.xlane.xlu0 %2727
          %2729 = vadd.xlane.f32.xlu0 %v2666
          %v2730 = vpop.xlane.xlu0 %2729
          %2731 = vadd.xlane.f32.xlu0 %v2668
          %v2732 = vpop.xlane.xlu0 %2731
          %2733 = vadd.xlane.f32.xlu0 %v2670
          %v2734 = vpop.xlane.xlu0 %2733
          %2735 = vadd.xlane.f32.xlu0 %v2672
          %v2736 = vpop.xlane.xlu0 %2735
          %v2737 = vlog2.pop %v2674
          %v2738 = vmul.f32 %v2737, 0.6931472
          %v2739 = vlog2.pop %v2676
          %v2740 = vmul.f32 %v2739, 0.6931472
          %v2741 = vlog2.pop %v2678
          %v2742 = vmul.f32 %v2741, 0.6931472
          %v2743 = vlog2.pop %v2680
          %v2744 = vmul.f32 %v2743, 0.6931472
          %v2745 = vlog2.pop %v2682
          %v2746 = vmul.f32 %v2745, 0.6931472
          %v2747 = vlog2.pop %v2684
          %v2748 = vmul.f32 %v2747, 0.6931472
          %v2749 = vlog2.pop %v2686
          %v2750 = vmul.f32 %v2749, 0.6931472
          %v2751 = vlog2.pop %v2688
          %v2752 = vmul.f32 %v2751, 0.6931472
          %v2753 = vlog2.pop %v2690
          %v2754 = vmul.f32 %v2753, 0.6931472
          %v2755 = vlog2.pop %v2692
          %v2756 = vmul.f32 %v2755, 0.6931472
          %v2757 = vlog2.pop %v2694
          %v2758 = vmul.f32 %v2757, 0.6931472
          %v2759 = vlog2.pop %v2696
          %v2760 = vmul.f32 %v2759, 0.6931472
          %v2761 = vlog2.pop %v2698
          %v2762 = vmul.f32 %v2761, 0.6931472
          %v2763 = vlog2.pop %v2700
          %v2764 = vmul.f32 %v2763, 0.6931472
          %v2765 = vlog2.pop %v2702
          %v2766 = vmul.f32 %v2765, 0.6931472
          %v2767 = vlog2.pop %v2704
          %v2768 = vmul.f32 %v2767, 0.6931472
          %v2769 = vlog2.pop %v2706
          %v2770 = vmul.f32 %v2769, 0.6931472
          %v2771 = vlog2.pop %v2708
          %v2772 = vmul.f32 %v2771, 0.6931472
          %v2773 = vlog2.pop %v2710
          %v2774 = vmul.f32 %v2773, 0.6931472
          %v2775 = vlog2.pop %v2712
          %v2776 = vmul.f32 %v2775, 0.6931472
          %v2777 = vlog2.pop %v2714
          %v2778 = vmul.f32 %v2777, 0.6931472
          %v2779 = vlog2.pop %v2716
          %v2780 = vmul.f32 %v2779, 0.6931472
          %v2781 = vlog2.pop %v2718
          %v2782 = vmul.f32 %v2781, 0.6931472
          %v2783 = vlog2.pop %v2720
          %v2784 = vmul.f32 %v2783, 0.6931472
          %v2785 = vlog2.pop %v2722
          %v2786 = vmul.f32 %v2785, 0.6931472
          %v2787 = vlog2.pop %v2724
          %v2788 = vmul.f32 %v2787, 0.6931472
          %v2789 = vlog2.pop %v2726
          %v2790 = vmul.f32 %v2789, 0.6931472
          %v2791 = vlog2.pop %v2728
          %v2792 = vmul.f32 %v2791, 0.6931472
          %v2793 = vlog2.pop %v2730
          %v2794 = vmul.f32 %v2793, 0.6931472
          %v2795 = vlog2.pop %v2732
          %v2796 = vmul.f32 %v2795, 0.6931472
          %v2797 = vlog2.pop %v2734
          %v2798 = vmul.f32 %v2797, 0.6931472
          %v2799 = vlog2.pop %v2736
          %v2800 = vmul.f32 %v2799, 0.6931472
          %v2801 = vsub.f32 %v2577, %v2738
          %v2802 = vsub.f32 %v2578, %v2740
          %v2803 = vsub.f32 %v2579, %v2742
          %v2804 = vsub.f32 %v2580, %v2744
          %v2805 = vsub.f32 %v2581, %v2746
          %v2806 = vsub.f32 %v2582, %v2748
          %v2807 = vsub.f32 %v2583, %v2750
          %v2808 = vsub.f32 %v2584, %v2752
          %v2809 = vsub.f32 %v2585, %v2754
          %v2810 = vsub.f32 %v2586, %v2756
          %v2811 = vsub.f32 %v2587, %v2758
          %v2812 = vsub.f32 %v2588, %v2760
          %v2813 = vsub.f32 %v2589, %v2762
          %v2814 = vsub.f32 %v2590, %v2764
          %v2815 = vsub.f32 %v2591, %v2766
          %v2816 = vsub.f32 %v2592, %v2768
          %v2817 = vsub.f32 %v2593, %v2770
          %v2818 = vsub.f32 %v2594, %v2772
          %v2819 = vsub.f32 %v2595, %v2774
          %v2820 = vsub.f32 %v2596, %v2776
          %v2821 = vsub.f32 %v2597, %v2778
          %v2822 = vsub.f32 %v2598, %v2780
          %v2823 = vsub.f32 %v2599, %v2782
          %v2824 = vsub.f32 %v2600, %v2784
          %v2825 = vsub.f32 %v2601, %v2786
          %v2826 = vsub.f32 %v2602, %v2788
          %v2827 = vsub.f32 %v2603, %v2790
          %v2828 = vsub.f32 %v2604, %v2792
          %v2829 = vsub.f32 %v2605, %v2794
          %v2830 = vsub.f32 %v2606, %v2796
          %v2831 = vsub.f32 %v2607, %v2798
          %v2832 = vsub.f32 %v2608, %v2800
          %2833 = vst [vmem:[#allocation14] sm:$0xff] %v2801
          %2834 = vst [vmem:[#allocation14 + $0x8] sm:$0xff] %v2802
          %2835 = vst [vmem:[#allocation14 + $0x10] sm:$0xff] %v2803
          %2836 = vst [vmem:[#allocation14 + $0x18] sm:$0xff] %v2804
          %2837 = vst [vmem:[#allocation14 + $0x20] sm:$0xff] %v2805
          %2838 = vst [vmem:[#allocation14 + $0x28] sm:$0xff] %v2806
          %2839 = vst [vmem:[#allocation14 + $0x30] sm:$0xff] %v2807
          %2840 = vst [vmem:[#allocation14 + $0x38] sm:$0xff] %v2808
          %2841 = vst [vmem:[#allocation14 + $0x40] sm:$0xff] %v2809
          %2842 = vst [vmem:[#allocation14 + $0x48] sm:$0xff] %v2810
          %2843 = vst [vmem:[#allocation14 + $0x50] sm:$0xff] %v2811
          %2844 = vst [vmem:[#allocation14 + $0x58] sm:$0xff] %v2812
          %2845 = vst [vmem:[#allocation14 + $0x60] sm:$0xff] %v2813
          %2846 = vst [vmem:[#allocation14 + $0x68] sm:$0xff] %v2814
          %2847 = vst [vmem:[#allocation14 + $0x70] sm:$0xff] %v2815
          %2848 = vst [vmem:[#allocation14 + $0x78] sm:$0xff] %v2816
          %2849 = vst [vmem:[#allocation14 + $0x80] sm:$0xff] %v2817
          %2850 = vst [vmem:[#allocation14 + $0x88] sm:$0xff] %v2818
          %2851 = vst [vmem:[#allocation14 + $0x90] sm:$0xff] %v2819
          %2852 = vst [vmem:[#allocation14 + $0x98] sm:$0xff] %v2820
          %2853 = vst [vmem:[#allocation14 + $0xa0] sm:$0xff] %v2821
          %2854 = vst [vmem:[#allocation14 + $0xa8] sm:$0xff] %v2822
          %2855 = vst [vmem:[#allocation14 + $0xb0] sm:$0xff] %v2823
          %2856 = vst [vmem:[#allocation14 + $0xb8] sm:$0xff] %v2824
          %2857 = vst [vmem:[#allocation14 + $0xc0] sm:$0xff] %v2825
          %2858 = vst [vmem:[#allocation14 + $0xc8] sm:$0xff] %v2826
          %2859 = vst [vmem:[#allocation14 + $0xd0] sm:$0xff] %v2827
          %2860 = vst [vmem:[#allocation14 + $0xd8] sm:$0xff] %v2828
          %2861 = vst [vmem:[#allocation14 + $0xe0] sm:$0xff] %v2829
          %2862 = vst [vmem:[#allocation14 + $0xe8] sm:$0xff] %v2830
          %2863 = vst [vmem:[#allocation14 + $0xf0] sm:$0xff] %v2831
          %2864 = vst [vmem:[#allocation14 + $0xf8] sm:$0xff] %v2832
        $region84: #{tpu_custom_call.1} parent=51 // pred_fallthru
          _
        // Predicated region
        $region85: #{tpu_custom_call.1} parent=51 // pred_check
          %p2865 = pneg %p227
        $region86: #{tpu_custom_call.1} parent=51 // pred_check_branch
          %2867 = sbr.rel (%p2865) target = $region88
        $region87: #{tpu_custom_call.1} parent=51 // pred_region
          %s2868 = smul.u32 32, %s29
          %s2870 = ssub.s32 4096, 4096
          %2871 = vsyncadd [#allocation5], %s2870
          %s2872 = smul.addr %s2868, 128
          %s2873 = scalar_lea.hbm %s8, %s2872
          %s2874 = sshll.u32 [#allocation14], 4
          %s2875 = int_to_ptr.vmem [resolvable:$true] %s2874
          %2880 = dma.vmem_to_hbm [thread:$0]  %s2875, 4096, %s2873, [#allocation5], 128, 128, 8
        $region88: #{tpu_custom_call.1} parent=51 // pred_fallthru
          _
        // Predicated region
        $region89: #{tpu_custom_call.1} parent=51 // pred_check
          %p2881 = pneg %p227
        $region90: #{tpu_custom_call.1} parent=51 // pred_check_branch
          %2883 = sbr.rel (%p2881) target = $region92
        $region91: #{tpu_custom_call.1} parent=51 // pred_region
          %2884 = dma.done [#allocation5], 4096
        $region92: #{tpu_custom_call.1} parent=51 // pred_fallthru
          _
      $region52: #{tpu_custom_call.1} parent=5 // pred_fallthru
        _
      %p2885 = scmp.le.s32.totalorder 2, %s19
      // Predicated region
      $region93: #{tpu_custom_call.1} parent=5 // pred_check
        %p2886 = pneg %p2885
      $region94: #{tpu_custom_call.1} parent=5 // pred_check_branch
        %2888 = sbr.rel (%p2886) target = $region96
      $region95: #{tpu_custom_call.1} parent=5 // pred_region
        %s2889 = ssub.s32 %s19, 2
      $region96: #{tpu_custom_call.1} parent=5 // pred_fallthru
        _
    $region6: #{tpu_custom_call.1} parent=1 // loop_footer
      %s23 = sadd.s32 1, %s19
    $region7: #{tpu_custom_call.1} parent=1 // loop_footer_branch
      %18 = sbr.rel target = $region3
    $region8: #{tpu_custom_call.1} parent=1 // loop_exit
      _
    %2890 = vsyncpa [#allocation4], 1
    %s2891 = scalar_lea.sflag [#allocation4], 1
    %2892 = vsyncpa %s2891, 1
    %2893 = vsyncpa [#allocation7], 1
    %2894 = vsyncpa [#allocation10], 1
    %2895 = vsyncpa [#allocation13], 1
    %2896 = vsyncpa [#allocation5], 1
    %s2897 = scalar_lea.sflag [#allocation5], 1
    %2898 = vsyncpa %s2897, 1

</llo_original>
